<compile_context>
chip_gen: v5e
topology: v5e:2x2
jax: 0.10.0
libtpu: 0.0.40
codegen_flags: <defaults>
</compile_context>

<pallas_src>
import math
import functools

import jax
import jax.numpy as jnp
from jax.experimental import pallas as pl
from jax.experimental.pallas import tpu as pltpu

SMEM = pltpu.MemorySpace.SMEM

NEG = -1e30  # finite "minus infinity": keeps softmax / log_softmax NaN-free


# ----------------------------------------------------------------------------
# Fused decode-step kernel (one batch tile of TB problem instances per program)
# ----------------------------------------------------------------------------
def gpn_step_kernel(
    # activations (blocked on batch)
    data_ref, x_ref, h0_ref, c0_ref, mask_ref,
    # weights (pinned, bf16) and packed bias slabs (f32)
    embed_ref,
    wg1_ref, wg2_ref, wg3_ref, bgnn_ref,
    wref_ref, bref_ref,
    wlstm_ref, blstm_ref,
    gqw_ref, pqw_ref, vecs_ref,
    r_ref,                       # (3,) f32 in SMEM: r1, r2, r3
    # outputs (blocked on batch)
    logp_ref, sel_ref, h_out_ref, c_out_ref, xnext_ref,
    *, C):
  f32 = jnp.float32
  bf16 = jnp.bfloat16
  TB, A, L = mask_ref.shape
  Din, E = embed_ref.shape
  H = gqw_ref.shape[0]

  # -------- node embedding + 3-layer gated GNN (rows = TB*L) ----------------
  # NOTE: in the reference model data (and hence ctx/e) change every decode step
  # via the remaining-length feature, so the encode block stays in the step
  # kernel; it is computed exactly once per call and shared by all agents.
  data = data_ref[...].reshape(TB * L, Din)
  emb = jnp.dot(data.astype(bf16), embed_ref[...],
                preferred_element_type=f32)                                   # (TB*L, E)
  h = emb
  for idx, wg in enumerate((wg1_ref, wg2_ref, wg3_ref)):
    # fused [W | A] -> one matmul with 2H output columns
    la = (jnp.dot(h.astype(bf16), wg[...], preferred_element_type=f32)
          + bgnn_ref[idx:idx + 1, :])                                         # (TB*L, 2H)
    lin = la[:, :H]
    agg = la[:, H:]
    r = r_ref[idx]
    h = r * lin + (1.0 - r) * jnp.maximum(agg, 0.0)
  ctx = h                                                                     # (TB*L, H)

  # -------- fused reference projections (glimpse || pointer), once ----------
  e_cat = (jnp.dot(ctx.astype(bf16), wref_ref[...], preferred_element_type=f32)
           + bref_ref[...])                                                   # (TB*L, 2H)
  e_glm = e_cat[:, :H].reshape(TB, L, H)
  e_ptr = e_cat[:, H:].reshape(TB, L, H)

  # -------- LSTMCell: one fused (E+H, 4H) matmul, gates i|f|g|o --------------
  x = x_ref[...].reshape(TB * A, E)
  h_prev = h0_ref[...].reshape(TB * A, H)
  c_prev = c0_ref[...].reshape(TB * A, H)
  xh = jnp.concatenate([x, h_prev], axis=1).astype(bf16)                      # (TB*A, E+H)
  gates = (jnp.dot(xh, wlstm_ref[...], preferred_element_type=f32)
           + blstm_ref[...])                                                  # (TB*A, 4H)
  i_g = jax.nn.sigmoid(gates[:, 0:H])
  f_g = jax.nn.sigmoid(gates[:, H:2 * H])
  g_g = jnp.tanh(gates[:, 2 * H:3 * H])
  o_g = jax.nn.sigmoid(gates[:, 3 * H:4 * H])
  c_new = f_g * c_prev + i_g * g_g
  h_lstm = o_g * jnp.tanh(c_new)
  h_out_ref[...] = h_lstm.reshape(TB, A, H)
  c_out_ref[...] = c_new.reshape(TB, A, H)

  mask = mask_ref[...]                                                        # (TB, A, L)

  glm_bq = vecs_ref[0:1, :]
  glm_v = vecs_ref[1:2, :].reshape(1, 1, 1, H)
  ptr_bq = vecs_ref[2:3, :]
  ptr_v = vecs_ref[3:4, :].reshape(1, 1, 1, H)

  def attention_scores(q_in, wq_ref, bq, v, e3):
    q = (jnp.dot(q_in.astype(bf16), wq_ref[...], preferred_element_type=f32)
         + bq).reshape(TB, A, H)
    t = jnp.tanh(q[:, :, None, :] + e3[:, None, :, :])                        # (TB,A,L,H)
    return jnp.sum(v * t, axis=-1)                                            # (TB,A,L)

  # -------- glimpse: tanh attention + masked softmax readout ----------------
  u_g = attention_scores(h_lstm, gqw_ref, glm_bq, glm_v, e_glm)
  lg = jnp.where(mask > 0.5, NEG, u_g)
  mg = jnp.max(lg, axis=-1, keepdims=True)
  pg = jnp.exp(lg - mg)
  pg = pg / jnp.sum(pg, axis=-1, keepdims=True)                               # exact softmax
  h_att = jnp.einsum('bal,blh->bah', pg, e_glm,
                     preferred_element_type=f32).reshape(TB * A, H)           # (TB*A, H)

  # -------- pointer: tanh-clipped logits + state mask ------------------------
  u_p = attention_scores(h_att, pqw_ref, ptr_bq, ptr_v, e_ptr)
  logits = jnp.where(mask > 0.5, NEG, C * jnp.tanh(u_p))                      # (TB, A, L)

  # -------- greedy decode + inter-agent conflict masking ---------------------
  # TODO(synk): 'sampling' decode (multinomial + resampling) not implemented.
  node_idx2 = jax.lax.broadcasted_iota(jnp.int32, (TB, L), 1)
  node_idx3 = jax.lax.broadcasted_iota(jnp.int32, (TB, A, L), 2)
  agent_idx3 = jax.lax.broadcasted_iota(jnp.int32, (TB, A, L), 1)

  sels = []
  for k in range(A):
    row = logits[:, k, :]                                                     # (TB, L)
    mx = jnp.max(row, axis=-1, keepdims=True)
    first = jnp.min(jnp.where(row >= mx, node_idx2, L), axis=-1,
                    keepdims=True)                                            # (TB,1) i32
    sels.append(first)
    if k < A - 1:
      # mask the selected node for later agents, except the end depot (last col)
      hit = ((agent_idx3 > k) & (node_idx3 == first[:, :, None])
             & (node_idx3 != (L - 1)))
      logits = jnp.where(hit, NEG, logits)
  sel_all = jnp.concatenate(sels, axis=1)                                     # (TB, A) i32

  # single log_softmax over the cumulatively-masked logits (equivalent to the
  # reference's per-agent renormalisation chain -- log_softmax is idempotent).
  m = jnp.max(logits, axis=-1, keepdims=True)
  lse = m + jnp.log(jnp.sum(jnp.exp(logits - m), axis=-1, keepdims=True))
  logp_ref[...] = logits - lse
  sel_ref[...] = sel_all[:, :, None]

  # next-step LSTM input: one-hot matmul gather reusing node_idx3.
  # TODO(synk): the reference gathers from the re-encoded (post-update) node
  # embedding; without the environment we gather from the current-step embedding.
  onehot = (node_idx3 == sel_all[:, :, None]).astype(f32)                     # (TB, A, L)
  xnext_ref[...] = jnp.einsum('bal,ble->bae', onehot, emb.reshape(TB, L, E),
                              preferred_element_type=f32)


# ----------------------------------------------------------------------------
# Wrapper: single pallas_call, batch-gridded, weights pinned
# ----------------------------------------------------------------------------
def gpn_decode_step(params, data, x0, h0, c0, mask, tanh_clipping, *, tb=1):
  B, A, L = mask.shape
  Din = data.shape[-1]
  E = params['node_embed'].shape[1]
  H = params['gqW'].shape[0]
  assert B % tb == 0, "batch tile must divide batch"
  grid = (B // tb,)

  bf16 = jnp.bfloat16
  def w(name):                      # bf16 weights for MXU (2x throughput, half VMEM)
    return params[name].astype(bf16)

  def tiled(*tail):                 # blocked on batch, trailing dims full
    nd = len(tail)
    return pl.BlockSpec((tb,) + tuple(tail),
                        lambda b, _n=nd: (b,) + (0,) * _n)

  def pinned(arr):                  # whole weight, same block every iteration
    nd = arr.ndim
    return pl.BlockSpec(arr.shape, lambda b, _n=nd: (0,) * _n)

  weight_ops = [
      w('node_embed'),                                   # (Din, E)   bf16
      w('Wg1'), w('Wg2'), w('Wg3'), params['bgnn'],      # fused GNN  + (3, 2H) f32
      w('Wref'), params['bref'],                         # fused ref proj + (1, 2H)
      w('Wlstm'), params['blstm'],                       # fused LSTM + (1, 4H)
      w('gqW'), w('pqW'), params['vecs'],                # queries + (4, H) vec slab
  ]
  args = [data, x0, h0, c0, mask] + weight_ops + [params['r']]

  in_specs = ([tiled(L, Din), tiled(A, E), tiled(A, H), tiled(A, H),
               tiled(A, L)]
              + [pinned(a) for a in weight_ops]
              + [pl.BlockSpec(memory_space=SMEM)])       # r1..r3 scalars

  out_shape = (jax.ShapeDtypeStruct((B, A, L), jnp.float32),   # log_p
               jax.ShapeDtypeStruct((B, A, 1), jnp.int32),     # selected
               jax.ShapeDtypeStruct((B, A, H), jnp.float32),   # h (hidden)
               jax.ShapeDtypeStruct((B, A, H), jnp.float32),   # c (cell)
               jax.ShapeDtypeStruct((B, A, E), jnp.float32))   # next LSTM input
  out_specs = [tiled(A, L), tiled(A, 1), tiled(A, H), tiled(A, H), tiled(A, E)]

  fn = pl.pallas_call(
      functools.partial(gpn_step_kernel, C=tanh_clipping),
      grid=grid,
      in_specs=in_specs,
      out_specs=out_specs,
      out_shape=out_shape,
      compiler_params=pltpu.CompilerParams(
          dimension_semantics=("parallel",),              # megacore sharding on v7x
          vmem_limit_bytes=48 * 1024 * 1024))             # > 16/32 MiB default, < 64 MiB v7x
  log_p, sel, h_new, c_new, x_next = fn(*args)
  return log_p, sel[..., 0], h_new, c_new, x_next


# ----------------------------------------------------------------------------
# Deterministic parameter init (shapes from GPN.__init__ / Attention.__init__),
# pre-fused / packed for the kernel.
# ----------------------------------------------------------------------------
def init_params(key, input_dim, E, H):
  ks = iter(jax.random.split(key, 64))

  def u(shape, fan):
    s = 1.0 / math.sqrt(fan)
    return jax.random.uniform(next(ks), shape, jnp.float32, -s, s)

  p = {}
  p['node_embed'] = u((input_dim, E), E)
  p['init_placeholder'] = u((E,), E)
  # gated-GNN layer l: fused [W_l | agg_l] weights and [b_l | ab_l] biases
  p['Wg1'] = jnp.concatenate([u((E, H), E), u((E, H), E)], axis=1)
  p['Wg2'] = jnp.concatenate([u((H, H), H), u((H, H), H)], axis=1)
  p['Wg3'] = jnp.concatenate([u((H, H), H), u((H, H), H)], axis=1)
  p['bgnn'] = jnp.stack(
      [jnp.concatenate([u((H,), E), u((H,), E)]),
       jnp.concatenate([u((H,), H), u((H,), H)]),
       jnp.concatenate([u((H,), H), u((H,), H)])], axis=0)     # (3, 2H)
  p['r'] = jnp.ones((3,), jnp.float32)                          # r1, r2, r3 = 1
  # LSTMCell fused: rows [W_ih^T ; W_hh^T], columns in gate order i|f|g|o
  p['Wlstm'] = jnp.concatenate([u((E, 4 * H), H), u((H, 4 * H), H)], axis=0)
  p['blstm'] = u((1, 4 * H), H) + u((1, 4 * H), H)              # b_ih + b_hh
  # fused reference projections [glimpse | pointer] (Conv1d k=1 == Linear)
  p['Wref'] = jnp.concatenate([u((H, H), H), u((H, H), H)], axis=1)
  p['bref'] = jnp.concatenate([u((1, H), H), u((1, H), H)], axis=1)
  # query projections (different inputs -> kept separate)
  p['gqW'] = u((H, H), H)
  p['pqW'] = u((H, H), H)
  # packed small vectors: rows [glm_bq, glm_v, ptr_bq, ptr_v]
  p['vecs'] = jnp.concatenate(
      [u((1, H), H), u((1, H), H), u((1, H), H), u((1, H), H)], axis=0)  # (4, H)
  return p


# ----------------------------------------------------------------------------
if __name__ == "__main__":
  B, N_LOC, E, H, A = 2, 8, 32, 32, 2
  L = N_LOC + 2                 # graph_size + 2 depots
  INPUT_DIM = 4 + A             # 3 coords + prize + per-agent length feature
  TANH_CLIP = 10.0

  key = jax.random.PRNGKey(0)
  k_par, k_loc, k_dep, k_prz = jax.random.split(key, 4)
  params = init_params(k_par, INPUT_DIM, E, H)

  # synthetic problem inputs (OP-style, 3-D coordinates)
  loc = jax.random.uniform(k_loc, (B, N_LOC, 3), jnp.float32)
  depot = jax.random.uniform(k_dep, (B, 3), jnp.float32)
  prize_nodes = jax.random.uniform(k_prz, (B, N_LOC), jnp.float32)
  max_length = jnp.full((B,), 4.0, jnp.float32)

  loc_full = jnp.concatenate([depot[:, None, :], loc, depot[:, None, :]], axis=1)  # (B,L,3)
  # TODO(synk): state.get_remaining_length(k) requires problem.make_state; use
  # the initial remaining length == max_length for every agent (first step).
  dist = jnp.linalg.norm(depot[:, None, :] - loc_full, axis=-1)                    # (B,L)
  ml_feat = (max_length[:, None] - dist)[:, :, None] / max_length[:, None, None]   # (B,L,1)
  ml = jnp.concatenate([ml_feat] * A, axis=2)                                      # (B,L,A)
  prize = jnp.concatenate(
      [jnp.zeros((B, 1)), prize_nodes, jnp.zeros((B, 1))], axis=1)[:, :, None]     # (B,L,1)
  data = jnp.concatenate([loc_full, prize, ml], axis=-1)                           # (B,L,6)

  # TODO(synk): state.get_mask(k) is problem-specific; mask only the start depot.
  mask = jnp.zeros((B, A, L), jnp.float32).at[:, :, 0].set(1.0)

  x0 = jnp.tile(params['init_placeholder'][None, None, :], (B, A, 1))
  h0 = jnp.zeros((B, A, H), jnp.float32)
  c0 = jnp.zeros((B, A, H), jnp.float32)

  log_p, selected, h_new, c_new, x_next = gpn_decode_step(
      params, data, x0, h0, c0, mask, TANH_CLIP, tb=1)
  jax.block_until_ready((log_p, selected, h_new, c_new, x_next))

  assert log_p.shape == (B, A, L) and selected.shape == (B, A)
  assert h_new.shape == (B, A, H) and c_new.shape == (B, A, H)
  assert x_next.shape == (B, A, E)
  assert bool(jnp.isfinite(log_p).all())
  assert bool(jnp.allclose(jnp.exp(log_p).sum(-1), 1.0, atol=1e-3))
  assert bool((selected >= 0).all()) and bool((selected < L).all())
  assert bool((selected != 0).all())          # greedy never picks the masked depot
  print("KERNEL_OK")
</pallas_src>

<mosaic_0001>
module attributes {stable_mosaic.version = 11 : i64} {
  func.func @gpn_step_kernel(%arg0: i32, %arg1: memref<1x10x6xf32, #tpu.memory_space<vmem>>, %arg2: memref<1x2x32xf32, #tpu.memory_space<vmem>>, %arg3: memref<1x2x32xf32, #tpu.memory_space<vmem>>, %arg4: memref<1x2x32xf32, #tpu.memory_space<vmem>>, %arg5: memref<1x2x10xf32, #tpu.memory_space<vmem>>, %arg6: memref<6x32xbf16, #tpu.memory_space<vmem>>, %arg7: memref<32x64xbf16, #tpu.memory_space<vmem>>, %arg8: memref<32x64xbf16, #tpu.memory_space<vmem>>, %arg9: memref<32x64xbf16, #tpu.memory_space<vmem>>, %arg10: memref<3x64xf32, #tpu.memory_space<vmem>>, %arg11: memref<32x64xbf16, #tpu.memory_space<vmem>>, %arg12: memref<1x64xf32, #tpu.memory_space<vmem>>, %arg13: memref<64x128xbf16, #tpu.memory_space<vmem>>, %arg14: memref<1x128xf32, #tpu.memory_space<vmem>>, %arg15: memref<32x32xbf16, #tpu.memory_space<vmem>>, %arg16: memref<32x32xbf16, #tpu.memory_space<vmem>>, %arg17: memref<4x32xf32, #tpu.memory_space<vmem>>, %arg18: memref<3xf32, #tpu.memory_space<smem>>, %arg19: memref<1x2x10xf32, #tpu.memory_space<vmem>>, %arg20: memref<1x2x1xi32, #tpu.memory_space<vmem>>, %arg21: memref<1x2x32xf32, #tpu.memory_space<vmem>>, %arg22: memref<1x2x32xf32, #tpu.memory_space<vmem>>, %arg23: memref<1x2x32xf32, #tpu.memory_space<vmem>>) attributes {dimension_semantics = [#tpu.dimension_semantics<parallel>], iteration_bounds = array<i64: 2>, scalar_prefetch = 0 : i64, scratch_operands = 0 : i64, tpu.core_type = #tpu.core_type<tc>, window_params = [{transform_indices = @transform_0, window_bounds = array<i64: 1, 10, 6>}, {transform_indices = @transform_1, window_bounds = array<i64: 1, 2, 32>}, {transform_indices = @transform_2, window_bounds = array<i64: 1, 2, 32>}, {transform_indices = @transform_3, window_bounds = array<i64: 1, 2, 32>}, {transform_indices = @transform_4, window_bounds = array<i64: 1, 2, 10>}, {pipeline_mode = #tpu.pipeline_mode<synchronous>, transform_indices = @transform_5, window_bounds = array<i64: 6, 32>}, {pipeline_mode = #tpu.pipeline_mode<synchronous>, transform_indices = @transform_6, window_bounds = array<i64: 32, 64>}, {pipeline_mode = #tpu.pipeline_mode<synchronous>, transform_indices = @transform_7, window_bounds = array<i64: 32, 64>}, {pipeline_mode = #tpu.pipeline_mode<synchronous>, transform_indices = @transform_8, window_bounds = array<i64: 32, 64>}, {pipeline_mode = #tpu.pipeline_mode<synchronous>, transform_indices = @transform_9, window_bounds = array<i64: 3, 64>}, {pipeline_mode = #tpu.pipeline_mode<synchronous>, transform_indices = @transform_10, window_bounds = array<i64: 32, 64>}, {pipeline_mode = #tpu.pipeline_mode<synchronous>, transform_indices = @transform_11, window_bounds = array<i64: 1, 64>}, {pipeline_mode = #tpu.pipeline_mode<synchronous>, transform_indices = @transform_12, window_bounds = array<i64: 64, 128>}, {pipeline_mode = #tpu.pipeline_mode<synchronous>, transform_indices = @transform_13, window_bounds = array<i64: 1, 128>}, {pipeline_mode = #tpu.pipeline_mode<synchronous>, transform_indices = @transform_14, window_bounds = array<i64: 32, 32>}, {pipeline_mode = #tpu.pipeline_mode<synchronous>, transform_indices = @transform_15, window_bounds = array<i64: 32, 32>}, {pipeline_mode = #tpu.pipeline_mode<synchronous>, transform_indices = @transform_16, window_bounds = array<i64: 4, 32>}, {transform_indices = @transform_17, window_bounds = array<i64: 3>}, {transform_indices = @transform_18, window_bounds = array<i64: 1, 2, 10>}, {transform_indices = @transform_19, window_bounds = array<i64: 1, 2, 1>}, {transform_indices = @transform_20, window_bounds = array<i64: 1, 2, 32>}, {transform_indices = @transform_21, window_bounds = array<i64: 1, 2, 32>}, {transform_indices = @transform_22, window_bounds = array<i64: 1, 2, 32>}]} {
    %c0 = arith.constant 0 : index
    %c0_0 = arith.constant 0 : index
    %c0_1 = arith.constant 0 : index
    %0 = vector.load %arg1[%c0, %c0_0, %c0_1] : memref<1x10x6xf32, #tpu.memory_space<vmem>>, vector<1x10x6xf32>
    %1 = vector.shape_cast %0 : vector<1x10x6xf32> to vector<10x6xf32>
    %2 = arith.truncf %1 : vector<10x6xf32> to vector<10x6xbf16>
    %c0_2 = arith.constant 0 : index
    %c0_3 = arith.constant 0 : index
    %3 = vector.load %arg6[%c0_2, %c0_3] : memref<6x32xbf16, #tpu.memory_space<vmem>>, vector<6x32xbf16>
    %cst = arith.constant dense<0.000000e+00> : vector<10x32xf32>
    %4 = tpu.matmul %2, %3, %cst {dimension_numbers = #tpu.dot_dimension_numbers<[1], [0], [0], [1], [0, 0, 1, 1], [], []>} : vector<10x6xbf16>, vector<6x32xbf16>, vector<10x32xf32> -> vector<10x32xf32>
    %5 = arith.truncf %4 : vector<10x32xf32> to vector<10x32xbf16>
    %c0_4 = arith.constant 0 : index
    %c0_5 = arith.constant 0 : index
    %6 = vector.load %arg7[%c0_4, %c0_5] : memref<32x64xbf16, #tpu.memory_space<vmem>>, vector<32x64xbf16>
    %cst_6 = arith.constant dense<0.000000e+00> : vector<10x64xf32>
    %7 = tpu.matmul %5, %6, %cst_6 {dimension_numbers = #tpu.dot_dimension_numbers<[1], [0], [0], [1], [0, 0, 1, 1], [], []>} : vector<10x32xbf16>, vector<32x64xbf16>, vector<10x64xf32> -> vector<10x64xf32>
    %c0_7 = arith.constant 0 : index
    %c0_8 = arith.constant 0 : index
    %8 = vector.load %arg10[%c0_7, %c0_8] : memref<3x64xf32, #tpu.memory_space<vmem>>, vector<1x64xf32>
    %9 = vector.broadcast %8 : vector<1x64xf32> to vector<10x64xf32>
    %10 = arith.addf %7, %9 : vector<10x64xf32>
    %11 = vector.extract_strided_slice %10 {offsets = [0, 0], sizes = [10, 32], strides = [1, 1]} : vector<10x64xf32> to vector<10x32xf32>
    %12 = vector.extract_strided_slice %10 {offsets = [0, 32], sizes = [10, 32], strides = [1, 1]} : vector<10x64xf32> to vector<10x32xf32>
    %c0_9 = arith.constant 0 : index
    %13 = memref.load %arg18[%c0_9] : memref<3xf32, #tpu.memory_space<smem>>
    %14 = vector.broadcast %13 : f32 to vector<10x32xf32>
    %15 = arith.mulf %14, %11 : vector<10x32xf32>
    %cst_10 = arith.constant 1.000000e+00 : f32
    %16 = arith.subf %cst_10, %13 : f32
    %cst_11 = arith.constant 0.000000e+00 : f32
    %17 = vector.broadcast %cst_11 : f32 to vector<10x32xf32>
    %18 = arith.maximumf %12, %17 : vector<10x32xf32>
    %19 = vector.broadcast %16 : f32 to vector<10x32xf32>
    %20 = arith.mulf %19, %18 : vector<10x32xf32>
    %21 = arith.addf %15, %20 : vector<10x32xf32>
    %22 = arith.truncf %21 : vector<10x32xf32> to vector<10x32xbf16>
    %c0_12 = arith.constant 0 : index
    %c0_13 = arith.constant 0 : index
    %23 = vector.load %arg8[%c0_12, %c0_13] : memref<32x64xbf16, #tpu.memory_space<vmem>>, vector<32x64xbf16>
    %cst_14 = arith.constant dense<0.000000e+00> : vector<10x64xf32>
    %24 = tpu.matmul %22, %23, %cst_14 {dimension_numbers = #tpu.dot_dimension_numbers<[1], [0], [0], [1], [0, 0, 1, 1], [], []>} : vector<10x32xbf16>, vector<32x64xbf16>, vector<10x64xf32> -> vector<10x64xf32>
    %c1 = arith.constant 1 : index
    %c0_15 = arith.constant 0 : index
    %25 = vector.load %arg10[%c1, %c0_15] : memref<3x64xf32, #tpu.memory_space<vmem>>, vector<1x64xf32>
    %26 = vector.broadcast %25 : vector<1x64xf32> to vector<10x64xf32>
    %27 = arith.addf %24, %26 : vector<10x64xf32>
    %28 = vector.extract_strided_slice %27 {offsets = [0, 0], sizes = [10, 32], strides = [1, 1]} : vector<10x64xf32> to vector<10x32xf32>
    %29 = vector.extract_strided_slice %27 {offsets = [0, 32], sizes = [10, 32], strides = [1, 1]} : vector<10x64xf32> to vector<10x32xf32>
    %c1_16 = arith.constant 1 : index
    %30 = memref.load %arg18[%c1_16] : memref<3xf32, #tpu.memory_space<smem>>
    %31 = vector.broadcast %30 : f32 to vector<10x32xf32>
    %32 = arith.mulf %31, %28 : vector<10x32xf32>
    %cst_17 = arith.constant 1.000000e+00 : f32
    %33 = arith.subf %cst_17, %30 : f32
    %cst_18 = arith.constant 0.000000e+00 : f32
    %34 = vector.broadcast %cst_18 : f32 to vector<10x32xf32>
    %35 = arith.maximumf %29, %34 : vector<10x32xf32>
    %36 = vector.broadcast %33 : f32 to vector<10x32xf32>
    %37 = arith.mulf %36, %35 : vector<10x32xf32>
    %38 = arith.addf %32, %37 : vector<10x32xf32>
    %39 = arith.truncf %38 : vector<10x32xf32> to vector<10x32xbf16>
    %c0_19 = arith.constant 0 : index
    %c0_20 = arith.constant 0 : index
    %40 = vector.load %arg9[%c0_19, %c0_20] : memref<32x64xbf16, #tpu.memory_space<vmem>>, vector<32x64xbf16>
    %cst_21 = arith.constant dense<0.000000e+00> : vector<10x64xf32>
    %41 = tpu.matmul %39, %40, %cst_21 {dimension_numbers = #tpu.dot_dimension_numbers<[1], [0], [0], [1], [0, 0, 1, 1], [], []>} : vector<10x32xbf16>, vector<32x64xbf16>, vector<10x64xf32> -> vector<10x64xf32>
    %c2 = arith.constant 2 : index
    %c0_22 = arith.constant 0 : index
    %42 = vector.load %arg10[%c2, %c0_22] : memref<3x64xf32, #tpu.memory_space<vmem>>, vector<1x64xf32>
    %43 = vector.broadcast %42 : vector<1x64xf32> to vector<10x64xf32>
    %44 = arith.addf %41, %43 : vector<10x64xf32>
    %45 = vector.extract_strided_slice %44 {offsets = [0, 0], sizes = [10, 32], strides = [1, 1]} : vector<10x64xf32> to vector<10x32xf32>
    %46 = vector.extract_strided_slice %44 {offsets = [0, 32], sizes = [10, 32], strides = [1, 1]} : vector<10x64xf32> to vector<10x32xf32>
    %c2_23 = arith.constant 2 : index
    %47 = memref.load %arg18[%c2_23] : memref<3xf32, #tpu.memory_space<smem>>
    %48 = vector.broadcast %47 : f32 to vector<10x32xf32>
    %49 = arith.mulf %48, %45 : vector<10x32xf32>
    %cst_24 = arith.constant 1.000000e+00 : f32
    %50 = arith.subf %cst_24, %47 : f32
    %cst_25 = arith.constant 0.000000e+00 : f32
    %51 = vector.broadcast %cst_25 : f32 to vector<10x32xf32>
    %52 = arith.maximumf %46, %51 : vector<10x32xf32>
    %53 = vector.broadcast %50 : f32 to vector<10x32xf32>
    %54 = arith.mulf %53, %52 : vector<10x32xf32>
    %55 = arith.addf %49, %54 : vector<10x32xf32>
    %56 = arith.truncf %55 : vector<10x32xf32> to vector<10x32xbf16>
    %c0_26 = arith.constant 0 : index
    %c0_27 = arith.constant 0 : index
    %57 = vector.load %arg11[%c0_26, %c0_27] : memref<32x64xbf16, #tpu.memory_space<vmem>>, vector<32x64xbf16>
    %cst_28 = arith.constant dense<0.000000e+00> : vector<10x64xf32>
    %58 = tpu.matmul %56, %57, %cst_28 {dimension_numbers = #tpu.dot_dimension_numbers<[1], [0], [0], [1], [0, 0, 1, 1], [], []>} : vector<10x32xbf16>, vector<32x64xbf16>, vector<10x64xf32> -> vector<10x64xf32>
    %c0_29 = arith.constant 0 : index
    %c0_30 = arith.constant 0 : index
    %59 = vector.load %arg12[%c0_29, %c0_30] : memref<1x64xf32, #tpu.memory_space<vmem>>, vector<1x64xf32>
    %60 = vector.broadcast %59 : vector<1x64xf32> to vector<10x64xf32>
    %61 = arith.addf %58, %60 : vector<10x64xf32>
    %62 = vector.extract_strided_slice %61 {offsets = [0, 0], sizes = [10, 32], strides = [1, 1]} : vector<10x64xf32> to vector<10x32xf32>
    %63 = vector.shape_cast %62 : vector<10x32xf32> to vector<1x10x32xf32>
    %64 = vector.extract_strided_slice %61 {offsets = [0, 32], sizes = [10, 32], strides = [1, 1]} : vector<10x64xf32> to vector<10x32xf32>
    %65 = vector.shape_cast %64 : vector<10x32xf32> to vector<1x10x32xf32>
    %c0_31 = arith.constant 0 : index
    %c0_32 = arith.constant 0 : index
    %c0_33 = arith.constant 0 : index
    %66 = vector.load %arg2[%c0_31, %c0_32, %c0_33] : memref<1x2x32xf32, #tpu.memory_space<vmem>>, vector<1x2x32xf32>
    %67 = vector.shape_cast %66 : vector<1x2x32xf32> to vector<2x32xf32>
    %c0_34 = arith.constant 0 : index
    %c0_35 = arith.constant 0 : index
    %c0_36 = arith.constant 0 : index
    %68 = vector.load %arg3[%c0_34, %c0_35, %c0_36] : memref<1x2x32xf32, #tpu.memory_space<vmem>>, vector<1x2x32xf32>
    %69 = vector.shape_cast %68 : vector<1x2x32xf32> to vector<2x32xf32>
    %c0_37 = arith.constant 0 : index
    %c0_38 = arith.constant 0 : index
    %c0_39 = arith.constant 0 : index
    %70 = vector.load %arg4[%c0_37, %c0_38, %c0_39] : memref<1x2x32xf32, #tpu.memory_space<vmem>>, vector<1x2x32xf32>
    %71 = vector.shape_cast %70 : vector<1x2x32xf32> to vector<2x32xf32>
    %72 = tpu.concatenate %67, %69 in 1 : vector<2x32xf32>, vector<2x32xf32> -> vector<2x64xf32>
    %73 = arith.truncf %72 : vector<2x64xf32> to vector<2x64xbf16>
    %c0_40 = arith.constant 0 : index
    %c0_41 = arith.constant 0 : index
    %74 = vector.load %arg13[%c0_40, %c0_41] : memref<64x128xbf16, #tpu.memory_space<vmem>>, vector<64x128xbf16>
    %cst_42 = arith.constant dense<0.000000e+00> : vector<2x128xf32>
    %75 = tpu.matmul %73, %74, %cst_42 {dimension_numbers = #tpu.dot_dimension_numbers<[1], [0], [0], [1], [0, 0, 1, 1], [], []>} : vector<2x64xbf16>, vector<64x128xbf16>, vector<2x128xf32> -> vector<2x128xf32>
    %c0_43 = arith.constant 0 : index
    %c0_44 = arith.constant 0 : index
    %76 = vector.load %arg14[%c0_43, %c0_44] : memref<1x128xf32, #tpu.memory_space<vmem>>, vector<1x128xf32>
    %77 = vector.broadcast %76 : vector<1x128xf32> to vector<2x128xf32>
    %78 = arith.addf %75, %77 : vector<2x128xf32>
    %79 = vector.extract_strided_slice %78 {offsets = [0, 0], sizes = [2, 32], strides = [1, 1]} : vector<2x128xf32> to vector<2x32xf32>
    %80 = arith.negf %79 : vector<2x32xf32>
    %81 = math.exp %80 : vector<2x32xf32>
    %cst_45 = arith.constant 1.000000e+00 : f32
    %82 = vector.broadcast %cst_45 : f32 to vector<2x32xf32>
    %83 = arith.addf %82, %81 : vector<2x32xf32>
    %84 = arith.divf %82, %83 : vector<2x32xf32>
    %85 = vector.extract_strided_slice %78 {offsets = [0, 32], sizes = [2, 32], strides = [1, 1]} : vector<2x128xf32> to vector<2x32xf32>
    %86 = arith.negf %85 : vector<2x32xf32>
    %87 = math.exp %86 : vector<2x32xf32>
    %cst_46 = arith.constant 1.000000e+00 : f32
    %88 = vector.broadcast %cst_46 : f32 to vector<2x32xf32>
    %89 = arith.addf %88, %87 : vector<2x32xf32>
    %90 = arith.divf %88, %89 : vector<2x32xf32>
    %91 = vector.extract_strided_slice %78 {offsets = [0, 64], sizes = [2, 32], strides = [1, 1]} : vector<2x128xf32> to vector<2x32xf32>
    %92 = math.tanh %91 : vector<2x32xf32>
    %93 = vector.extract_strided_slice %78 {offsets = [0, 96], sizes = [2, 32], strides = [1, 1]} : vector<2x128xf32> to vector<2x32xf32>
    %94 = arith.negf %93 : vector<2x32xf32>
    %95 = math.exp %94 : vector<2x32xf32>
    %cst_47 = arith.constant 1.000000e+00 : f32
    %96 = vector.broadcast %cst_47 : f32 to vector<2x32xf32>
    %97 = arith.addf %96, %95 : vector<2x32xf32>
    %98 = arith.divf %96, %97 : vector<2x32xf32>
    %99 = arith.mulf %90, %71 : vector<2x32xf32>
    %100 = arith.mulf %84, %92 : vector<2x32xf32>
    %101 = arith.addf %99, %100 : vector<2x32xf32>
    %102 = math.tanh %101 : vector<2x32xf32>
    %103 = arith.mulf %98, %102 : vector<2x32xf32>
    %104 = vector.shape_cast %103 : vector<2x32xf32> to vector<1x2x32xf32>
    %c0_48 = arith.constant 0 : index
    %c0_49 = arith.constant 0 : index
    %c0_50 = arith.constant 0 : index
    %105 = vector.load %arg21[%c0_48, %c0_49, %c0_50] : memref<1x2x32xf32, #tpu.memory_space<vmem>>, vector<1x2x32xf32>
    tpu.vector_store %arg21[%c0_48, %c0_49, %c0_50], %104 {strides = array<i32>} : memref<1x2x32xf32, #tpu.memory_space<vmem>>, vector<1x2x32xf32>,
    %106 = vector.shape_cast %101 : vector<2x32xf32> to vector<1x2x32xf32>
    %c0_51 = arith.constant 0 : index
    %c0_52 = arith.constant 0 : index
    %c0_53 = arith.constant 0 : index
    %107 = vector.load %arg22[%c0_51, %c0_52, %c0_53] : memref<1x2x32xf32, #tpu.memory_space<vmem>>, vector<1x2x32xf32>
    tpu.vector_store %arg22[%c0_51, %c0_52, %c0_53], %106 {strides = array<i32>} : memref<1x2x32xf32, #tpu.memory_space<vmem>>, vector<1x2x32xf32>,
    %c0_54 = arith.constant 0 : index
    %c0_55 = arith.constant 0 : index
    %c0_56 = arith.constant 0 : index
    %108 = vector.load %arg5[%c0_54, %c0_55, %c0_56] : memref<1x2x10xf32, #tpu.memory_space<vmem>>, vector<1x2x10xf32>
    %c0_57 = arith.constant 0 : index
    %c0_58 = arith.constant 0 : index
    %109 = vector.load %arg17[%c0_57, %c0_58] : memref<4x32xf32, #tpu.memory_space<vmem>>, vector<1x32xf32>
    %c1_59 = arith.constant 1 : index
    %c0_60 = arith.constant 0 : index
    %110 = vector.load %arg17[%c1_59, %c0_60] : memref<4x32xf32, #tpu.memory_space<vmem>>, vector<1x32xf32>
    %111 = vector.shape_cast %110 : vector<1x32xf32> to vector<1x1x1x32xf32>
    %c2_61 = arith.constant 2 : index
    %c0_62 = arith.constant 0 : index
    %112 = vector.load %arg17[%c2_61, %c0_62] : memref<4x32xf32, #tpu.memory_space<vmem>>, vector<1x32xf32>
    %c3 = arith.constant 3 : index
    %c0_63 = arith.constant 0 : index
    %113 = vector.load %arg17[%c3, %c0_63] : memref<4x32xf32, #tpu.memory_space<vmem>>, vector<1x32xf32>
    %114 = vector.shape_cast %113 : vector<1x32xf32> to vector<1x1x1x32xf32>
    %115 = arith.truncf %103 : vector<2x32xf32> to vector<2x32xbf16>
    %c0_64 = arith.constant 0 : index
    %c0_65 = arith.constant 0 : index
    %116 = vector.load %arg15[%c0_64, %c0_65] : memref<32x32xbf16, #tpu.memory_space<vmem>>, vector<32x32xbf16>
    %cst_66 = arith.constant dense<0.000000e+00> : vector<2x32xf32>
    %117 = tpu.matmul %115, %116, %cst_66 {dimension_numbers = #tpu.dot_dimension_numbers<[1], [0], [0], [1], [0, 0, 1, 1], [], []>} : vector<2x32xbf16>, vector<32x32xbf16>, vector<2x32xf32> -> vector<2x32xf32>
    %118 = vector.broadcast %109 : vector<1x32xf32> to vector<2x32xf32>
    %119 = arith.addf %117, %118 : vector<2x32xf32>
    %120 = vector.shape_cast %119 : vector<2x32xf32> to vector<1x2x32xf32>
    %121 = vector.shape_cast %120 : vector<1x2x32xf32> to vector<1x2x1x32xf32>
    %122 = vector.shape_cast %63 : vector<1x10x32xf32> to vector<1x1x10x32xf32>
    %123 = vector.broadcast %121 : vector<1x2x1x32xf32> to vector<1x2x10x32xf32>
    %124 = vector.broadcast %122 : vector<1x1x10x32xf32> to vector<1x2x10x32xf32>
    %125 = arith.addf %123, %124 : vector<1x2x10x32xf32>
    %126 = math.tanh %125 : vector<1x2x10x32xf32>
    %127 = vector.broadcast %111 : vector<1x1x1x32xf32> to vector<1x2x10x32xf32>
    %128 = arith.mulf %127, %126 : vector<1x2x10x32xf32>
    %cst_67 = arith.constant dense<0.000000e+00> : vector<1x2x10xf32>
    %129 = vector.multi_reduction <add>, %128, %cst_67 [3] : vector<1x2x10x32xf32> to vector<1x2x10xf32>
    %cst_68 = arith.constant 5.000000e-01 : f32
    %130 = vector.broadcast %cst_68 : f32 to vector<1x2x10xf32>
    %131 = arith.cmpf ogt, %108, %130 : vector<1x2x10xf32>
    %cst_69 = arith.constant -1.000000e+30 : f32
    %132 = vector.broadcast %cst_69 : f32 to vector<1x2x10xf32>
    %133 = arith.select %131, %132, %129 : vector<1x2x10xi1>, vector<1x2x10xf32>
    %cst_70 = arith.constant dense<0xFF800000> : vector<1x2xf32>
    %134 = vector.multi_reduction <maximumf>, %133, %cst_70 [2] : vector<1x2x10xf32> to vector<1x2xf32>
    %135 = vector.shape_cast %134 : vector<1x2xf32> to vector<1x2x1xf32>
    %136 = vector.broadcast %135 : vector<1x2x1xf32> to vector<1x2x10xf32>
    %137 = arith.subf %133, %136 : vector<1x2x10xf32>
    %138 = math.exp %137 : vector<1x2x10xf32>
    %cst_71 = arith.constant dense<0.000000e+00> : vector<1x2xf32>
    %139 = vector.multi_reduction <add>, %138, %cst_71 [2] : vector<1x2x10xf32> to vector<1x2xf32>
    %140 = vector.shape_cast %139 : vector<1x2xf32> to vector<1x2x1xf32>
    %141 = vector.broadcast %140 : vector<1x2x1xf32> to vector<1x2x10xf32>
    %142 = arith.divf %138, %141 : vector<1x2x10xf32>
    "tpu.trace_start"() <{level = 10 : i32, message = "bal,blh->bah"}> : () -> ()
    %cst_72 = arith.constant dense<0.000000e+00> : vector<1x2x32xf32>
    %143 = tpu.matmul %142, %63, %cst_72 {dimension_numbers = #tpu.dot_dimension_numbers<[2], [1], [1], [2], [0, 0, 0, 1, 1, 2], [0], [0]>} : vector<1x2x10xf32>, vector<1x10x32xf32>, vector<1x2x32xf32> -> vector<1x2x32xf32>
    "tpu.trace_stop"() : () -> ()
    %144 = vector.shape_cast %143 : vector<1x2x32xf32> to vector<2x32xf32>
    %145 = arith.truncf %144 : vector<2x32xf32> to vector<2x32xbf16>
    %c0_73 = arith.constant 0 : index
    %c0_74 = arith.constant 0 : index
    %146 = vector.load %arg16[%c0_73, %c0_74] : memref<32x32xbf16, #tpu.memory_space<vmem>>, vector<32x32xbf16>
    %cst_75 = arith.constant dense<0.000000e+00> : vector<2x32xf32>
    %147 = tpu.matmul %145, %146, %cst_75 {dimension_numbers = #tpu.dot_dimension_numbers<[1], [0], [0], [1], [0, 0, 1, 1], [], []>} : vector<2x32xbf16>, vector<32x32xbf16>, vector<2x32xf32> -> vector<2x32xf32>
    %148 = vector.broadcast %112 : vector<1x32xf32> to vector<2x32xf32>
    %149 = arith.addf %147, %148 : vector<2x32xf32>
    %150 = vector.shape_cast %149 : vector<2x32xf32> to vector<1x2x32xf32>
    %151 = vector.shape_cast %150 : vector<1x2x32xf32> to vector<1x2x1x32xf32>
    %152 = vector.shape_cast %65 : vector<1x10x32xf32> to vector<1x1x10x32xf32>
    %153 = vector.broadcast %151 : vector<1x2x1x32xf32> to vector<1x2x10x32xf32>
    %154 = vector.broadcast %152 : vector<1x1x10x32xf32> to vector<1x2x10x32xf32>
    %155 = arith.addf %153, %154 : vector<1x2x10x32xf32>
    %156 = math.tanh %155 : vector<1x2x10x32xf32>
    %157 = vector.broadcast %114 : vector<1x1x1x32xf32> to vector<1x2x10x32xf32>
    %158 = arith.mulf %157, %156 : vector<1x2x10x32xf32>
    %cst_76 = arith.constant dense<0.000000e+00> : vector<1x2x10xf32>
    %159 = vector.multi_reduction <add>, %158, %cst_76 [3] : vector<1x2x10x32xf32> to vector<1x2x10xf32>
    %cst_77 = arith.constant 5.000000e-01 : f32
    %160 = vector.broadcast %cst_77 : f32 to vector<1x2x10xf32>
    %161 = arith.cmpf ogt, %108, %160 : vector<1x2x10xf32>
    %162 = math.tanh %159 : vector<1x2x10xf32>
    %cst_78 = arith.constant 1.000000e+01 : f32
    %163 = vector.broadcast %cst_78 : f32 to vector<1x2x10xf32>
    %164 = arith.mulf %163, %162 : vector<1x2x10xf32>
    %cst_79 = arith.constant -1.000000e+30 : f32
    %165 = vector.broadcast %cst_79 : f32 to vector<1x2x10xf32>
    %166 = arith.select %161, %165, %164 : vector<1x2x10xi1>, vector<1x2x10xf32>
    %167 = tpu.iota {dimensions = array<i32: 1>} : vector<1x10xi32>
    %168 = tpu.iota {dimensions = array<i32: 2>} : vector<1x2x10xi32>
    %169 = tpu.iota {dimensions = array<i32: 1>} : vector<1x2x10xi32>
    %170 = vector.extract_strided_slice %166 {offsets = [0, 0, 0], sizes = [1, 1, 10], strides = [1, 1, 1]} : vector<1x2x10xf32> to vector<1x1x10xf32>
    %171 = vector.shape_cast %170 : vector<1x1x10xf32> to vector<1x10xf32>
    %cst_80 = arith.constant dense<0xFF800000> : vector<1xf32>
    %172 = vector.multi_reduction <maximumf>, %171, %cst_80 [1] : vector<1x10xf32> to vector<1xf32>
    %173 = vector.shape_cast %172 : vector<1xf32> to vector<1x1xf32>
    %174 = vector.broadcast %173 : vector<1x1xf32> to vector<1x10xf32>
    %175 = arith.cmpf oge, %171, %174 : vector<1x10xf32>
    %c10_i32 = arith.constant 10 : i32
    %176 = vector.broadcast %c10_i32 : i32 to vector<1x10xi32>
    %177 = arith.select %175, %167, %176 : vector<1x10xi1>, vector<1x10xi32>
    %cst_81 = arith.constant dense<2147483647> : vector<1xi32>
    %178 = vector.multi_reduction <minsi>, %177, %cst_81 [1] : vector<1x10xi32> to vector<1xi32>
    %179 = vector.shape_cast %178 : vector<1xi32> to vector<1x1xi32>
    %c0_i32 = arith.constant 0 : i32
    %180 = vector.broadcast %c0_i32 : i32 to vector<1x2x10xi32>
    %181 = arith.cmpi sgt, %169, %180 : vector<1x2x10xi32>
    %182 = vector.shape_cast %179 : vector<1x1xi32> to vector<1x1x1xi32>
    %183 = vector.broadcast %182 : vector<1x1x1xi32> to vector<1x2x10xi32>
    %184 = arith.cmpi eq, %168, %183 : vector<1x2x10xi32>
    %185 = arith.andi %181, %184 : vector<1x2x10xi1>
    %c9_i32 = arith.constant 9 : i32
    %186 = vector.broadcast %c9_i32 : i32 to vector<1x2x10xi32>
    %187 = arith.cmpi ne, %168, %186 : vector<1x2x10xi32>
    %188 = arith.andi %185, %187 : vector<1x2x10xi1>
    %cst_82 = arith.constant -1.000000e+30 : f32
    %189 = vector.broadcast %cst_82 : f32 to vector<1x2x10xf32>
    %190 = arith.select %188, %189, %166 : vector<1x2x10xi1>, vector<1x2x10xf32>
    %191 = vector.extract_strided_slice %190 {offsets = [0, 1, 0], sizes = [1, 1, 10], strides = [1, 1, 1]} : vector<1x2x10xf32> to vector<1x1x10xf32>
    %192 = vector.shape_cast %191 : vector<1x1x10xf32> to vector<1x10xf32>
    %cst_83 = arith.constant dense<0xFF800000> : vector<1xf32>
    %193 = vector.multi_reduction <maximumf>, %192, %cst_83 [1] : vector<1x10xf32> to vector<1xf32>
    %194 = vector.shape_cast %193 : vector<1xf32> to vector<1x1xf32>
    %195 = vector.broadcast %194 : vector<1x1xf32> to vector<1x10xf32>
    %196 = arith.cmpf oge, %192, %195 : vector<1x10xf32>
    %c10_i32_84 = arith.constant 10 : i32
    %197 = vector.broadcast %c10_i32_84 : i32 to vector<1x10xi32>
    %198 = arith.select %196, %167, %197 : vector<1x10xi1>, vector<1x10xi32>
    %cst_85 = arith.constant dense<2147483647> : vector<1xi32>
    %199 = vector.multi_reduction <minsi>, %198, %cst_85 [1] : vector<1x10xi32> to vector<1xi32>
    %200 = vector.shape_cast %199 : vector<1xi32> to vector<1x1xi32>
    %201 = tpu.concatenate %179, %200 in 1 : vector<1x1xi32>, vector<1x1xi32> -> vector<1x2xi32>
    %cst_86 = arith.constant dense<0xFF800000> : vector<1x2xf32>
    %202 = vector.multi_reduction <maximumf>, %190, %cst_86 [2] : vector<1x2x10xf32> to vector<1x2xf32>
    %203 = vector.shape_cast %202 : vector<1x2xf32> to vector<1x2x1xf32>
    %204 = vector.broadcast %203 : vector<1x2x1xf32> to vector<1x2x10xf32>
    %205 = arith.subf %190, %204 : vector<1x2x10xf32>
    %206 = math.exp %205 : vector<1x2x10xf32>
    %cst_87 = arith.constant dense<0.000000e+00> : vector<1x2xf32>
    %207 = vector.multi_reduction <add>, %206, %cst_87 [2] : vector<1x2x10xf32> to vector<1x2xf32>
    %208 = vector.shape_cast %207 : vector<1x2xf32> to vector<1x2x1xf32>
    %209 = math.log %208 : vector<1x2x1xf32>
    %210 = arith.addf %203, %209 : vector<1x2x1xf32>
    %211 = vector.broadcast %210 : vector<1x2x1xf32> to vector<1x2x10xf32>
    %212 = arith.subf %190, %211 : vector<1x2x10xf32>
    %c0_88 = arith.constant 0 : index
    %c0_89 = arith.constant 0 : index
    %c0_90 = arith.constant 0 : index
    %213 = vector.load %arg19[%c0_88, %c0_89, %c0_90] : memref<1x2x10xf32, #tpu.memory_space<vmem>>, vector<1x2x10xf32>
    tpu.vector_store %arg19[%c0_88, %c0_89, %c0_90], %212 {strides = array<i32>} : memref<1x2x10xf32, #tpu.memory_space<vmem>>, vector<1x2x10xf32>,
    %214 = vector.shape_cast %201 : vector<1x2xi32> to vector<1x2x1xi32>
    %c0_91 = arith.constant 0 : index
    %c0_92 = arith.constant 0 : index
    %c0_93 = arith.constant 0 : index
    %215 = vector.load %arg20[%c0_91, %c0_92, %c0_93] : memref<1x2x1xi32, #tpu.memory_space<vmem>>, vector<1x2x1xi32>
    tpu.vector_store %arg20[%c0_91, %c0_92, %c0_93], %214 {strides = array<i32>} : memref<1x2x1xi32, #tpu.memory_space<vmem>>, vector<1x2x1xi32>,
    %216 = vector.shape_cast %201 : vector<1x2xi32> to vector<1x2x1xi32>
    %217 = vector.broadcast %216 : vector<1x2x1xi32> to vector<1x2x10xi32>
    %218 = arith.cmpi eq, %168, %217 : vector<1x2x10xi32>
    %219 = arith.extui %218 : vector<1x2x10xi1> to vector<1x2x10xi32>
    %220 = arith.sitofp %219 : vector<1x2x10xi32> to vector<1x2x10xf32>
    %221 = vector.shape_cast %4 : vector<10x32xf32> to vector<1x10x32xf32>
    "tpu.trace_start"() <{level = 10 : i32, message = "bal,ble->bae"}> : () -> ()
    %cst_94 = arith.constant dense<0.000000e+00> : vector<1x2x32xf32>
    %222 = tpu.matmul %220, %221, %cst_94 {dimension_numbers = #tpu.dot_dimension_numbers<[2], [1], [1], [2], [0, 0, 0, 1, 1, 2], [0], [0]>} : vector<1x2x10xf32>, vector<1x10x32xf32>, vector<1x2x32xf32> -> vector<1x2x32xf32>
    "tpu.trace_stop"() : () -> ()
    %c0_95 = arith.constant 0 : index
    %c0_96 = arith.constant 0 : index
    %c0_97 = arith.constant 0 : index
    %223 = vector.load %arg23[%c0_95, %c0_96, %c0_97] : memref<1x2x32xf32, #tpu.memory_space<vmem>>, vector<1x2x32xf32>
    tpu.vector_store %arg23[%c0_95, %c0_96, %c0_97], %222 {strides = array<i32>} : memref<1x2x32xf32, #tpu.memory_space<vmem>>, vector<1x2x32xf32>,
    return
  }
  func.func @transform_0(%arg0: i32) -> (i32, i32, i32) {
    %c0_i32 = arith.constant 0 : i32
    %c0_i32_0 = arith.constant 0 : i32
    %c0_i32_1 = arith.constant 0 : i32
    return %arg0, %c0_i32, %c0_i32_0 : i32, i32, i32
  }
  func.func @transform_1(%arg0: i32) -> (i32, i32, i32) {
    %c0_i32 = arith.constant 0 : i32
    %c0_i32_0 = arith.constant 0 : i32
    %c0_i32_1 = arith.constant 0 : i32
    return %arg0, %c0_i32, %c0_i32_0 : i32, i32, i32
  }
  func.func @transform_2(%arg0: i32) -> (i32, i32, i32) {
    %c0_i32 = arith.constant 0 : i32
    %c0_i32_0 = arith.constant 0 : i32
    %c0_i32_1 = arith.constant 0 : i32
    return %arg0, %c0_i32, %c0_i32_0 : i32, i32, i32
  }
  func.func @transform_3(%arg0: i32) -> (i32, i32, i32) {
    %c0_i32 = arith.constant 0 : i32
    %c0_i32_0 = arith.constant 0 : i32
    %c0_i32_1 = arith.constant 0 : i32
    return %arg0, %c0_i32, %c0_i32_0 : i32, i32, i32
  }
  func.func @transform_4(%arg0: i32) -> (i32, i32, i32) {
    %c0_i32 = arith.constant 0 : i32
    %c0_i32_0 = arith.constant 0 : i32
    %c0_i32_1 = arith.constant 0 : i32
    return %arg0, %c0_i32, %c0_i32_0 : i32, i32, i32
  }
  func.func @transform_5(%arg0: i32) -> (i32, i32) {
    %c0_i32 = arith.constant 0 : i32
    %c0_i32_0 = arith.constant 0 : i32
    %c0_i32_1 = arith.constant 0 : i32
    return %c0_i32, %c0_i32_0 : i32, i32
  }
  func.func @transform_6(%arg0: i32) -> (i32, i32) {
    %c0_i32 = arith.constant 0 : i32
    %c0_i32_0 = arith.constant 0 : i32
    %c0_i32_1 = arith.constant 0 : i32
    return %c0_i32, %c0_i32_0 : i32, i32
  }
  func.func @transform_7(%arg0: i32) -> (i32, i32) {
    %c0_i32 = arith.constant 0 : i32
    %c0_i32_0 = arith.constant 0 : i32
    %c0_i32_1 = arith.constant 0 : i32
    return %c0_i32, %c0_i32_0 : i32, i32
  }
  func.func @transform_8(%arg0: i32) -> (i32, i32) {
    %c0_i32 = arith.constant 0 : i32
    %c0_i32_0 = arith.constant 0 : i32
    %c0_i32_1 = arith.constant 0 : i32
    return %c0_i32, %c0_i32_0 : i32, i32
  }
  func.func @transform_9(%arg0: i32) -> (i32, i32) {
    %c0_i32 = arith.constant 0 : i32
    %c0_i32_0 = arith.constant 0 : i32
    %c0_i32_1 = arith.constant 0 : i32
    return %c0_i32, %c0_i32_0 : i32, i32
  }
  func.func @transform_10(%arg0: i32) -> (i32, i32) {
    %c0_i32 = arith.constant 0 : i32
    %c0_i32_0 = arith.constant 0 : i32
    %c0_i32_1 = arith.constant 0 : i32
    return %c0_i32, %c0_i32_0 : i32, i32
  }
  func.func @transform_11(%arg0: i32) -> (i32, i32) {
    %c0_i32 = arith.constant 0 : i32
    %c0_i32_0 = arith.constant 0 : i32
    %c0_i32_1 = arith.constant 0 : i32
    return %c0_i32, %c0_i32_0 : i32, i32
  }
  func.func @transform_12(%arg0: i32) -> (i32, i32) {
    %c0_i32 = arith.constant 0 : i32
    %c0_i32_0 = arith.constant 0 : i32
    %c0_i32_1 = arith.constant 0 : i32
    return %c0_i32, %c0_i32_0 : i32, i32
  }
  func.func @transform_13(%arg0: i32) -> (i32, i32) {
    %c0_i32 = arith.constant 0 : i32
    %c0_i32_0 = arith.constant 0 : i32
    %c0_i32_1 = arith.constant 0 : i32
    return %c0_i32, %c0_i32_0 : i32, i32
  }
  func.func @transform_14(%arg0: i32) -> (i32, i32) {
    %c0_i32 = arith.constant 0 : i32
    %c0_i32_0 = arith.constant 0 : i32
    %c0_i32_1 = arith.constant 0 : i32
    return %c0_i32, %c0_i32_0 : i32, i32
  }
  func.func @transform_15(%arg0: i32) -> (i32, i32) {
    %c0_i32 = arith.constant 0 : i32
    %c0_i32_0 = arith.constant 0 : i32
    %c0_i32_1 = arith.constant 0 : i32
    return %c0_i32, %c0_i32_0 : i32, i32
  }
  func.func @transform_16(%arg0: i32) -> (i32, i32) {
    %c0_i32 = arith.constant 0 : i32
    %c0_i32_0 = arith.constant 0 : i32
    %c0_i32_1 = arith.constant 0 : i32
    return %c0_i32, %c0_i32_0 : i32, i32
  }
  func.func @transform_17(%arg0: i32) -> i32 {
    %c0_i32 = arith.constant 0 : i32
    %c0_i32_0 = arith.constant 0 : i32
    return %c0_i32 : i32
  }
  func.func @transform_18(%arg0: i32) -> (i32, i32, i32) {
    %c0_i32 = arith.constant 0 : i32
    %c0_i32_0 = arith.constant 0 : i32
    %c0_i32_1 = arith.constant 0 : i32
    return %arg0, %c0_i32, %c0_i32_0 : i32, i32, i32
  }
  func.func @transform_19(%arg0: i32) -> (i32, i32, i32) {
    %c0_i32 = arith.constant 0 : i32
    %c0_i32_0 = arith.constant 0 : i32
    %c0_i32_1 = arith.constant 0 : i32
    return %arg0, %c0_i32, %c0_i32_0 : i32, i32, i32
  }
  func.func @transform_20(%arg0: i32) -> (i32, i32, i32) {
    %c0_i32 = arith.constant 0 : i32
    %c0_i32_0 = arith.constant 0 : i32
    %c0_i32_1 = arith.constant 0 : i32
    return %arg0, %c0_i32, %c0_i32_0 : i32, i32, i32
  }
  func.func @transform_21(%arg0: i32) -> (i32, i32, i32) {
    %c0_i32 = arith.constant 0 : i32
    %c0_i32_0 = arith.constant 0 : i32
    %c0_i32_1 = arith.constant 0 : i32
    return %arg0, %c0_i32, %c0_i32_0 : i32, i32, i32
  }
  func.func @transform_22(%arg0: i32) -> (i32, i32, i32) {
    %c0_i32 = arith.constant 0 : i32
    %c0_i32_0 = arith.constant 0 : i32
    %c0_i32_1 = arith.constant 0 : i32
    return %arg0, %c0_i32, %c0_i32_0 : i32, i32, i32
  }
}

</mosaic_0001>

<llo_original>
// kernel: tpu_custom_call.1
$region0: #{tpu_custom_call.1}
  #allocation0 [shape = 'u32[]', space=smem, size = 0x4, offset = 0x4, fixed_abs, tag = 'smem constant byte address 0x4 - core index']
  #allocation1 [shape = 'u32[72,128]{1,0:T(1,128)}', space=vmem, size = 0x9000, scoped, tag = 'internal scratch']
  %s0 = inlined_call_operand.vmem [shape: f32[2,10,6], index: 0, kind: input, shape index: {}]
  %s1 = inlined_call_operand.vmem [shape: f32[2,2,32], index: 1, kind: input, shape index: {}]
  %s2 = inlined_call_operand.hbm [shape: f32[2,2,32], index: 2, kind: input, shape index: {}]
  %s3 = inlined_call_operand.hbm [shape: f32[2,2,32], index: 3, kind: input, shape index: {}]
  %s4 = inlined_call_operand.hbm [shape: f32[2,2,10], index: 4, kind: input, shape index: {}]
  %s5 = inlined_call_operand.hbm [shape: bf16[6,32], index: 5, kind: input, shape index: {}]
  %s6 = inlined_call_operand.vmem [shape: bf16[32,64], index: 6, kind: input, shape index: {}]
  %s7 = inlined_call_operand.hbm [shape: bf16[32,64], index: 7, kind: input, shape index: {}]
  %s8 = inlined_call_operand.hbm [shape: bf16[32,64], index: 8, kind: input, shape index: {}]
  %s9 = inlined_call_operand.hbm [shape: f32[3,64], index: 9, kind: input, shape index: {}]
  %s10 = inlined_call_operand.hbm [shape: bf16[32,64], index: 10, kind: input, shape index: {}]
  %s11 = inlined_call_operand.hbm [shape: f32[1,64], index: 11, kind: input, shape index: {}]
  %s12 = inlined_call_operand.vmem [shape: bf16[64,128], index: 12, kind: input, shape index: {}]
  %s13 = inlined_call_operand.hbm [shape: f32[1,128], index: 13, kind: input, shape index: {}]
  %s14 = inlined_call_operand.hbm [shape: bf16[32,32], index: 14, kind: input, shape index: {}]
  %s15 = inlined_call_operand.hbm [shape: bf16[32,32], index: 15, kind: input, shape index: {}]
  %s16 = inlined_call_operand.vmem [shape: f32[4,32], index: 16, kind: input, shape index: {}]
  %s17 = inlined_call_operand.vmem [shape: f32[3], index: 17, kind: input, shape index: {}]
  %s18 = inlined_call_operand.hbm [shape: f32[2,2,10], index: 18, kind: output, shape index: {0}]
  %s19 = inlined_call_operand.vmem [shape: s32[2,2,1], index: 19, kind: output, shape index: {1}]
  %s20 = inlined_call_operand.hbm [shape: f32[2,2,32], index: 20, kind: output, shape index: {2}]
  %s21 = inlined_call_operand.hbm [shape: f32[2,2,32], index: 21, kind: output, shape index: {3}]
  %s22 = inlined_call_operand.hbm [shape: f32[2,2,32], index: 22, kind: output, shape index: {4}]
  %23 = xla_tuple %s18, %s19, %s20, %s21, %s22
  %s24 = sld [smem:[#allocation0]]
  $region189: #{tpu_custom_call.1} parent=0
    _
  %s26 = ssub.s32 1, %s24
  %s27 = scalar_select 0, %s26, %s24
  $region1: #{tpu_custom_call.1} parent=0
    #allocation2 [shape = 'u8[2048]{0}', space=vmem, size = 0x800, scoped, tag = 'input window, operand 2']
    #allocation3 [shape = 's32[2]{0}', space=sflag, size = 0x8, scoped, tag = 'scoped memory for tpu_custom_call.1']
    #allocation4 [shape = 's32[2]{0}', space=sflag, size = 0x8, scoped, tag = 'scoped memory for tpu_custom_call.1']
    #allocation5 [shape = 's32[2]{0}', space=sflag, size = 0x8, scoped, tag = 'scoped memory for tpu_custom_call.1']
    #allocation6 [shape = 'u8[2048]{0}', space=vmem, size = 0x800, scoped, tag = 'input window, operand 3']
    #allocation7 [shape = 's32[2]{0}', space=sflag, size = 0x8, scoped, tag = 'scoped memory for tpu_custom_call.1']
    #allocation8 [shape = 'u8[2048]{0}', space=vmem, size = 0x800, scoped, tag = 'input window, operand 4']
    #allocation9 [shape = 'u8[2048]{0}', space=vmem, size = 0x800, scoped, tag = 'input window, operand 5, single buffered']
    #allocation10 [shape = 's32[1]{0}', space=sflag, size = 0x4, scoped, tag = 'scoped memory for tpu_custom_call.1']
    #allocation11 [shape = 'u8[8192]{0}', space=vmem, size = 0x2000, scoped, tag = 'input window, operand 7, single buffered']
    #allocation12 [shape = 'u8[8192]{0}', space=vmem, size = 0x2000, scoped, tag = 'input window, operand 8, single buffered']
    #allocation13 [shape = 's32[1]{0}', space=sflag, size = 0x4, scoped, tag = 'scoped memory for tpu_custom_call.1']
    #allocation14 [shape = 'u8[2048]{0}', space=vmem, size = 0x800, scoped, tag = 'input window, operand 9, single buffered']
    #allocation15 [shape = 'u8[8192]{0}', space=vmem, size = 0x2000, scoped, tag = 'input window, operand 10, single buffered']
    #allocation16 [shape = 's32[1]{0}', space=sflag, size = 0x4, scoped, tag = 'scoped memory for tpu_custom_call.1']
    #allocation17 [shape = 'u8[512]{0}', space=vmem, size = 0x400, scoped, tag = 'input window, operand 11, single buffered']
    #allocation18 [shape = 'u8[512]{0}', space=vmem, size = 0x400, scoped, tag = 'input window, operand 13, single buffered']
    #allocation19 [shape = 's32[1]{0}', space=sflag, size = 0x4, scoped, tag = 'scoped memory for tpu_custom_call.1']
    #allocation20 [shape = 'u8[8192]{0}', space=vmem, size = 0x2000, scoped, tag = 'input window, operand 14, single buffered']
    #allocation21 [shape = 'u8[8192]{0}', space=vmem, size = 0x2000, scoped, tag = 'input window, operand 15, single buffered']
    #allocation22 [shape = 's32[1]{0}', space=sflag, size = 0x4, scoped, tag = 'scoped memory for tpu_custom_call.1']
    #allocation23 [shape = 'u8[512]{0}', space=smem, size = 0x200, scoped, tag = 'input window, operand 17, single buffered']
    #allocation24 [shape = 'u8[2048]{0}', space=vmem, size = 0x800, scoped, tag = 'output window, operand 0']
    #allocation25 [shape = 'u8[2048]{0}', space=vmem, size = 0x800, scoped, tag = 'output window, operand 2']
    #allocation26 [shape = 's32[2]{0}', space=sflag, size = 0x8, scoped, tag = 'scoped memory for tpu_custom_call.1']
    #allocation27 [shape = 'u8[2048]{0}', space=vmem, size = 0x800, scoped, tag = 'output window, operand 3']
    #allocation28 [shape = 'u8[2048]{0}', space=vmem, size = 0x800, scoped, tag = 'output window, operand 4']
    #allocation29 [shape = 's32[2]{0}', space=sflag, size = 0x8, scoped, tag = 'scoped memory for tpu_custom_call.1']
    %28 = vsyncpa [#allocation3], 0
    %s29 = scalar_lea.sflag [#allocation3], 1
    %30 = vsyncpa %s29, 0
    %31 = vsyncpa [#allocation7], 0
    %s32 = scalar_lea.sflag [#allocation7], 1
    %33 = vsyncpa %s32, 0
    %34 = vsyncpa [#allocation10], 0
    %35 = vsyncpa [#allocation13], 0
    %36 = vsyncpa [#allocation16], 0
    %37 = vsyncpa [#allocation19], 0
    %38 = vsyncpa [#allocation22], 0
    %39 = vsyncpa [#allocation5], 0
    %40 = vsyncpa [#allocation4], 0
    %s41 = scalar_lea.sflag [#allocation4], 1
    %42 = vsyncpa %s41, 0
    %43 = vsyncpa [#allocation26], 0
    %s44 = scalar_lea.sflag [#allocation26], 1
    %45 = vsyncpa %s44, 0
    %46 = vsyncpa [#allocation29], 0
    %s47 = scalar_lea.sflag [#allocation29], 1
    %48 = vsyncpa %s47, 0
    loop: start=0, step=1, limit=4
    $region2: #{tpu_custom_call.1} parent=1 // loop_pre_header
      _
    $region3: #{tpu_custom_call.1} parent=1 // loop_header
      %s50 = sphi 0, %s54
      %p51 = scmp.ge.s32.totalorder %s50, 4
      %s60 = sphi 0, %s62
      %s63 = sphi 0, %s60
      %s64 = sphi 0, %s63
      %s80 = sphi 0, %s64
      %s86 = sphi 0, %s88
      %s89 = sphi 0, %s86
      %s90 = sphi 0, %s89
      %s106 = sphi 0, %s90
      %s112 = sphi 0, %s114
      %s115 = sphi 0, %s112
      %s116 = sphi 0, %s115
      %s132 = sphi 0, %s116
      %s138 = sphi 0, %s140
      %s141 = sphi 0, %s138
      %s142 = sphi 0, %s141
      %s158 = sphi 0, %s142
      %s164 = sphi 0, %s166
      %s167 = sphi 0, %s164
      %s168 = sphi 0, %s167
      %s184 = sphi 0, %s168
      %s188 = sphi 0, %s188
      %s190 = sphi 0, %s188
      %s191 = sphi 0, %s190
      %s205 = sphi 0, %s191
      %s209 = sphi 0, %s209
      %s211 = sphi 0, %s209
      %s212 = sphi 0, %s211
      %s226 = sphi 0, %s212
      %s230 = sphi 0, %s230
      %s232 = sphi 0, %s230
      %s233 = sphi 0, %s232
      %s247 = sphi 0, %s233
      %s251 = sphi 0, %s251
      %s253 = sphi 0, %s251
      %s254 = sphi 0, %s253
      %s268 = sphi 0, %s254
      %s272 = sphi 0, %s272
      %s274 = sphi 0, %s272
      %s275 = sphi 0, %s274
      %s289 = sphi 0, %s275
      %s293 = sphi 0, %s293
      %s295 = sphi 0, %s293
      %s296 = sphi 0, %s295
      %s310 = sphi 0, %s296
      %s314 = sphi 0, %s314
      %s316 = sphi 0, %s314
      %s317 = sphi 0, %s316
      %s331 = sphi 0, %s317
      %s335 = sphi 0, %s335
      %s337 = sphi 0, %s335
      %s338 = sphi 0, %s337
      %s352 = sphi 0, %s338
      %s356 = sphi 0, %s356
      %s358 = sphi 0, %s356
      %s359 = sphi 0, %s358
      %s373 = sphi 0, %s359
      %s377 = sphi 0, %s377
      %s379 = sphi 0, %s377
      %s380 = sphi 0, %s379
      %s394 = sphi 0, %s380
      %s398 = sphi 0, %s398
      %s400 = sphi 0, %s398
      %s401 = sphi 0, %s400
      %s415 = sphi 0, %s401
      %s419 = sphi 0, %s419
      %s421 = sphi 0, %s419
      %s422 = sphi 0, %s421
      %s436 = sphi 0, %s422
      %s440 = sphi 0, %s440
      %s442 = sphi 0, %s440
      %s443 = sphi 0, %s442
      %s457 = sphi 0, %s443
      %s463 = sphi 0, %s465
      %s466 = sphi 0, %s463
      %s467 = sphi 0, %s466
      %s483 = sphi 0, %s467
      %s489 = sphi 0, %s491
      %s492 = sphi 0, %s489
      %s493 = sphi 0, %s492
      %s509 = sphi 0, %s493
      %s515 = sphi 0, %s517
      %s518 = sphi 0, %s515
      %s519 = sphi 0, %s518
      %s535 = sphi 0, %s519
      %s541 = sphi 0, %s543
      %s544 = sphi 0, %s541
      %s545 = sphi 0, %s544
      %s561 = sphi 0, %s545
      %s567 = sphi 0, %s569
      %s570 = sphi 0, %s567
      %s571 = sphi 0, %s570
      %s587 = sphi 0, %s571
    $region4: #{tpu_custom_call.1} parent=1 // loop_header_branch
      %53 = sbr.rel (%p51) target = $region8
    $region5: #{tpu_custom_call.1} parent=1 // loop_body
      %s55 = ssub.s32 %s50, 1
      %s56 = ssub.s32 %s50, 2
      %s57 = sadd.s32 %s50, 1
      %s58 = ssub.s32 %s50, %s57
      %p59 = scmp.eq.s32.totalorder %s58, 0
      %s61 = sadd.s32 %s60, 1
      %s62 = scalar_select %p59, %s60, %s61
      %p65 = pneg %p59
      %p66 = scmp.eq.s32.totalorder %s50, 1
      %p67 = por %p65, %p66
      %p68 = scmp.ne.s32.totalorder %s60, %s63
      %p69 = scmp.eq.s32.totalorder %s50, 0
      %p70 = por %p68, %p69
      %p71 = scmp.ne.s32.totalorder %s60, %s63
      %p72 = scmp.eq.s32.totalorder %s55, 1
      %p73 = por %p71, %p72
      %p74 = scmp.ne.s32.totalorder %s63, %s64
      %p75 = scmp.eq.s32.totalorder %s55, 0
      %p76 = por %p74, %p75
      %p77 = scmp.ne.s32.totalorder %s63, %s64
      %p78 = scmp.eq.s32.totalorder %s56, 1
      %p79 = por %p77, %p78
      %p81 = scmp.ne.s32.totalorder %s64, %s80
      %p82 = scmp.eq.s32.totalorder %s56, 0
      %p83 = por %p81, %p82
      %s84 = ssub.s32 %s50, %s57
      %p85 = scmp.eq.s32.totalorder %s84, 0
      %s87 = sadd.s32 %s86, 1
      %s88 = scalar_select %p85, %s86, %s87
      %p91 = pneg %p85
      %p92 = scmp.eq.s32.totalorder %s50, 1
      %p93 = por %p91, %p92
      %p94 = scmp.ne.s32.totalorder %s86, %s89
      %p95 = scmp.eq.s32.totalorder %s50, 0
      %p96 = por %p94, %p95
      %p97 = scmp.ne.s32.totalorder %s86, %s89
      %p98 = scmp.eq.s32.totalorder %s55, 1
      %p99 = por %p97, %p98
      %p100 = scmp.ne.s32.totalorder %s89, %s90
      %p101 = scmp.eq.s32.totalorder %s55, 0
      %p102 = por %p100, %p101
      %p103 = scmp.ne.s32.totalorder %s89, %s90
      %p104 = scmp.eq.s32.totalorder %s56, 1
      %p105 = por %p103, %p104
      %p107 = scmp.ne.s32.totalorder %s90, %s106
      %p108 = scmp.eq.s32.totalorder %s56, 0
      %p109 = por %p107, %p108
      %s110 = ssub.s32 %s50, %s57
      %p111 = scmp.eq.s32.totalorder %s110, 0
      %s113 = sadd.s32 %s112, 1
      %s114 = scalar_select %p111, %s112, %s113
      %p117 = pneg %p111
      %p118 = scmp.eq.s32.totalorder %s50, 1
      %p119 = por %p117, %p118
      %p120 = scmp.ne.s32.totalorder %s112, %s115
      %p121 = scmp.eq.s32.totalorder %s50, 0
      %p122 = por %p120, %p121
      %p123 = scmp.ne.s32.totalorder %s112, %s115
      %p124 = scmp.eq.s32.totalorder %s55, 1
      %p125 = por %p123, %p124
      %p126 = scmp.ne.s32.totalorder %s115, %s116
      %p127 = scmp.eq.s32.totalorder %s55, 0
      %p128 = por %p126, %p127
      %p129 = scmp.ne.s32.totalorder %s115, %s116
      %p130 = scmp.eq.s32.totalorder %s56, 1
      %p131 = por %p129, %p130
      %p133 = scmp.ne.s32.totalorder %s116, %s132
      %p134 = scmp.eq.s32.totalorder %s56, 0
      %p135 = por %p133, %p134
      %s136 = ssub.s32 %s50, %s57
      %p137 = scmp.eq.s32.totalorder %s136, 0
      %s139 = sadd.s32 %s138, 1
      %s140 = scalar_select %p137, %s138, %s139
      %p143 = pneg %p137
      %p144 = scmp.eq.s32.totalorder %s50, 1
      %p145 = por %p143, %p144
      %p146 = scmp.ne.s32.totalorder %s138, %s141
      %p147 = scmp.eq.s32.totalorder %s50, 0
      %p148 = por %p146, %p147
      %p149 = scmp.ne.s32.totalorder %s138, %s141
      %p150 = scmp.eq.s32.totalorder %s55, 1
      %p151 = por %p149, %p150
      %p152 = scmp.ne.s32.totalorder %s141, %s142
      %p153 = scmp.eq.s32.totalorder %s55, 0
      %p154 = por %p152, %p153
      %p155 = scmp.ne.s32.totalorder %s141, %s142
      %p156 = scmp.eq.s32.totalorder %s56, 1
      %p157 = por %p155, %p156
      %p159 = scmp.ne.s32.totalorder %s142, %s158
      %p160 = scmp.eq.s32.totalorder %s56, 0
      %p161 = por %p159, %p160
      %s162 = ssub.s32 %s50, %s57
      %p163 = scmp.eq.s32.totalorder %s162, 0
      %s165 = sadd.s32 %s164, 1
      %s166 = scalar_select %p163, %s164, %s165
      %p169 = pneg %p163
      %p170 = scmp.eq.s32.totalorder %s50, 1
      %p171 = por %p169, %p170
      %p172 = scmp.ne.s32.totalorder %s164, %s167
      %p173 = scmp.eq.s32.totalorder %s50, 0
      %p174 = por %p172, %p173
      %p175 = scmp.ne.s32.totalorder %s164, %s167
      %p176 = scmp.eq.s32.totalorder %s55, 1
      %p177 = por %p175, %p176
      %p178 = scmp.ne.s32.totalorder %s167, %s168
      %p179 = scmp.eq.s32.totalorder %s55, 0
      %p180 = por %p178, %p179
      %p181 = scmp.ne.s32.totalorder %s167, %s168
      %p182 = scmp.eq.s32.totalorder %s56, 1
      %p183 = por %p181, %p182
      %p185 = scmp.ne.s32.totalorder %s168, %s184
      %p186 = scmp.eq.s32.totalorder %s56, 0
      %p187 = por %p185, %p186
      %s189 = sadd.s32 %s188, 1
      %p192 = scmp.eq.s32.totalorder %s50, 1
      %p193 = scmp.ne.s32.totalorder %s188, %s190
      %p194 = scmp.eq.s32.totalorder %s50, 0
      %p195 = por %p193, %p194
      %p196 = scmp.ne.s32.totalorder %s188, %s190
      %p197 = scmp.eq.s32.totalorder %s55, 1
      %p198 = por %p196, %p197
      %p199 = scmp.ne.s32.totalorder %s190, %s191
      %p200 = scmp.eq.s32.totalorder %s55, 0
      %p201 = por %p199, %p200
      %p202 = scmp.ne.s32.totalorder %s190, %s191
      %p203 = scmp.eq.s32.totalorder %s56, 1
      %p204 = por %p202, %p203
      %p206 = scmp.ne.s32.totalorder %s191, %s205
      %p207 = scmp.eq.s32.totalorder %s56, 0
      %p208 = por %p206, %p207
      %s210 = sadd.s32 %s209, 1
      %p213 = scmp.eq.s32.totalorder %s50, 1
      %p214 = scmp.ne.s32.totalorder %s209, %s211
      %p215 = scmp.eq.s32.totalorder %s50, 0
      %p216 = por %p214, %p215
      %p217 = scmp.ne.s32.totalorder %s209, %s211
      %p218 = scmp.eq.s32.totalorder %s55, 1
      %p219 = por %p217, %p218
      %p220 = scmp.ne.s32.totalorder %s211, %s212
      %p221 = scmp.eq.s32.totalorder %s55, 0
      %p222 = por %p220, %p221
      %p223 = scmp.ne.s32.totalorder %s211, %s212
      %p224 = scmp.eq.s32.totalorder %s56, 1
      %p225 = por %p223, %p224
      %p227 = scmp.ne.s32.totalorder %s212, %s226
      %p228 = scmp.eq.s32.totalorder %s56, 0
      %p229 = por %p227, %p228
      %s231 = sadd.s32 %s230, 1
      %p234 = scmp.eq.s32.totalorder %s50, 1
      %p235 = scmp.ne.s32.totalorder %s230, %s232
      %p236 = scmp.eq.s32.totalorder %s50, 0
      %p237 = por %p235, %p236
      %p238 = scmp.ne.s32.totalorder %s230, %s232
      %p239 = scmp.eq.s32.totalorder %s55, 1
      %p240 = por %p238, %p239
      %p241 = scmp.ne.s32.totalorder %s232, %s233
      %p242 = scmp.eq.s32.totalorder %s55, 0
      %p243 = por %p241, %p242
      %p244 = scmp.ne.s32.totalorder %s232, %s233
      %p245 = scmp.eq.s32.totalorder %s56, 1
      %p246 = por %p244, %p245
      %p248 = scmp.ne.s32.totalorder %s233, %s247
      %p249 = scmp.eq.s32.totalorder %s56, 0
      %p250 = por %p248, %p249
      %s252 = sadd.s32 %s251, 1
      %p255 = scmp.eq.s32.totalorder %s50, 1
      %p256 = scmp.ne.s32.totalorder %s251, %s253
      %p257 = scmp.eq.s32.totalorder %s50, 0
      %p258 = por %p256, %p257
      %p259 = scmp.ne.s32.totalorder %s251, %s253
      %p260 = scmp.eq.s32.totalorder %s55, 1
      %p261 = por %p259, %p260
      %p262 = scmp.ne.s32.totalorder %s253, %s254
      %p263 = scmp.eq.s32.totalorder %s55, 0
      %p264 = por %p262, %p263
      %p265 = scmp.ne.s32.totalorder %s253, %s254
      %p266 = scmp.eq.s32.totalorder %s56, 1
      %p267 = por %p265, %p266
      %p269 = scmp.ne.s32.totalorder %s254, %s268
      %p270 = scmp.eq.s32.totalorder %s56, 0
      %p271 = por %p269, %p270
      %s273 = sadd.s32 %s272, 1
      %p276 = scmp.eq.s32.totalorder %s50, 1
      %p277 = scmp.ne.s32.totalorder %s272, %s274
      %p278 = scmp.eq.s32.totalorder %s50, 0
      %p279 = por %p277, %p278
      %p280 = scmp.ne.s32.totalorder %s272, %s274
      %p281 = scmp.eq.s32.totalorder %s55, 1
      %p282 = por %p280, %p281
      %p283 = scmp.ne.s32.totalorder %s274, %s275
      %p284 = scmp.eq.s32.totalorder %s55, 0
      %p285 = por %p283, %p284
      %p286 = scmp.ne.s32.totalorder %s274, %s275
      %p287 = scmp.eq.s32.totalorder %s56, 1
      %p288 = por %p286, %p287
      %p290 = scmp.ne.s32.totalorder %s275, %s289
      %p291 = scmp.eq.s32.totalorder %s56, 0
      %p292 = por %p290, %p291
      %s294 = sadd.s32 %s293, 1
      %p297 = scmp.eq.s32.totalorder %s50, 1
      %p298 = scmp.ne.s32.totalorder %s293, %s295
      %p299 = scmp.eq.s32.totalorder %s50, 0
      %p300 = por %p298, %p299
      %p301 = scmp.ne.s32.totalorder %s293, %s295
      %p302 = scmp.eq.s32.totalorder %s55, 1
      %p303 = por %p301, %p302
      %p304 = scmp.ne.s32.totalorder %s295, %s296
      %p305 = scmp.eq.s32.totalorder %s55, 0
      %p306 = por %p304, %p305
      %p307 = scmp.ne.s32.totalorder %s295, %s296
      %p308 = scmp.eq.s32.totalorder %s56, 1
      %p309 = por %p307, %p308
      %p311 = scmp.ne.s32.totalorder %s296, %s310
      %p312 = scmp.eq.s32.totalorder %s56, 0
      %p313 = por %p311, %p312
      %s315 = sadd.s32 %s314, 1
      %p318 = scmp.eq.s32.totalorder %s50, 1
      %p319 = scmp.ne.s32.totalorder %s314, %s316
      %p320 = scmp.eq.s32.totalorder %s50, 0
      %p321 = por %p319, %p320
      %p322 = scmp.ne.s32.totalorder %s314, %s316
      %p323 = scmp.eq.s32.totalorder %s55, 1
      %p324 = por %p322, %p323
      %p325 = scmp.ne.s32.totalorder %s316, %s317
      %p326 = scmp.eq.s32.totalorder %s55, 0
      %p327 = por %p325, %p326
      %p328 = scmp.ne.s32.totalorder %s316, %s317
      %p329 = scmp.eq.s32.totalorder %s56, 1
      %p330 = por %p328, %p329
      %p332 = scmp.ne.s32.totalorder %s317, %s331
      %p333 = scmp.eq.s32.totalorder %s56, 0
      %p334 = por %p332, %p333
      %s336 = sadd.s32 %s335, 1
      %p339 = scmp.eq.s32.totalorder %s50, 1
      %p340 = scmp.ne.s32.totalorder %s335, %s337
      %p341 = scmp.eq.s32.totalorder %s50, 0
      %p342 = por %p340, %p341
      %p343 = scmp.ne.s32.totalorder %s335, %s337
      %p344 = scmp.eq.s32.totalorder %s55, 1
      %p345 = por %p343, %p344
      %p346 = scmp.ne.s32.totalorder %s337, %s338
      %p347 = scmp.eq.s32.totalorder %s55, 0
      %p348 = por %p346, %p347
      %p349 = scmp.ne.s32.totalorder %s337, %s338
      %p350 = scmp.eq.s32.totalorder %s56, 1
      %p351 = por %p349, %p350
      %p353 = scmp.ne.s32.totalorder %s338, %s352
      %p354 = scmp.eq.s32.totalorder %s56, 0
      %p355 = por %p353, %p354
      %s357 = sadd.s32 %s356, 1
      %p360 = scmp.eq.s32.totalorder %s50, 1
      %p361 = scmp.ne.s32.totalorder %s356, %s358
      %p362 = scmp.eq.s32.totalorder %s50, 0
      %p363 = por %p361, %p362
      %p364 = scmp.ne.s32.totalorder %s356, %s358
      %p365 = scmp.eq.s32.totalorder %s55, 1
      %p366 = por %p364, %p365
      %p367 = scmp.ne.s32.totalorder %s358, %s359
      %p368 = scmp.eq.s32.totalorder %s55, 0
      %p369 = por %p367, %p368
      %p370 = scmp.ne.s32.totalorder %s358, %s359
      %p371 = scmp.eq.s32.totalorder %s56, 1
      %p372 = por %p370, %p371
      %p374 = scmp.ne.s32.totalorder %s359, %s373
      %p375 = scmp.eq.s32.totalorder %s56, 0
      %p376 = por %p374, %p375
      %s378 = sadd.s32 %s377, 1
      %p381 = scmp.eq.s32.totalorder %s50, 1
      %p382 = scmp.ne.s32.totalorder %s377, %s379
      %p383 = scmp.eq.s32.totalorder %s50, 0
      %p384 = por %p382, %p383
      %p385 = scmp.ne.s32.totalorder %s377, %s379
      %p386 = scmp.eq.s32.totalorder %s55, 1
      %p387 = por %p385, %p386
      %p388 = scmp.ne.s32.totalorder %s379, %s380
      %p389 = scmp.eq.s32.totalorder %s55, 0
      %p390 = por %p388, %p389
      %p391 = scmp.ne.s32.totalorder %s379, %s380
      %p392 = scmp.eq.s32.totalorder %s56, 1
      %p393 = por %p391, %p392
      %p395 = scmp.ne.s32.totalorder %s380, %s394
      %p396 = scmp.eq.s32.totalorder %s56, 0
      %p397 = por %p395, %p396
      %s399 = sadd.s32 %s398, 1
      %p402 = scmp.eq.s32.totalorder %s50, 1
      %p403 = scmp.ne.s32.totalorder %s398, %s400
      %p404 = scmp.eq.s32.totalorder %s50, 0
      %p405 = por %p403, %p404
      %p406 = scmp.ne.s32.totalorder %s398, %s400
      %p407 = scmp.eq.s32.totalorder %s55, 1
      %p408 = por %p406, %p407
      %p409 = scmp.ne.s32.totalorder %s400, %s401
      %p410 = scmp.eq.s32.totalorder %s55, 0
      %p411 = por %p409, %p410
      %p412 = scmp.ne.s32.totalorder %s400, %s401
      %p413 = scmp.eq.s32.totalorder %s56, 1
      %p414 = por %p412, %p413
      %p416 = scmp.ne.s32.totalorder %s401, %s415
      %p417 = scmp.eq.s32.totalorder %s56, 0
      %p418 = por %p416, %p417
      %s420 = sadd.s32 %s419, 1
      %p423 = scmp.eq.s32.totalorder %s50, 1
      %p424 = scmp.ne.s32.totalorder %s419, %s421
      %p425 = scmp.eq.s32.totalorder %s50, 0
      %p426 = por %p424, %p425
      %p427 = scmp.ne.s32.totalorder %s419, %s421
      %p428 = scmp.eq.s32.totalorder %s55, 1
      %p429 = por %p427, %p428
      %p430 = scmp.ne.s32.totalorder %s421, %s422
      %p431 = scmp.eq.s32.totalorder %s55, 0
      %p432 = por %p430, %p431
      %p433 = scmp.ne.s32.totalorder %s421, %s422
      %p434 = scmp.eq.s32.totalorder %s56, 1
      %p435 = por %p433, %p434
      %p437 = scmp.ne.s32.totalorder %s422, %s436
      %p438 = scmp.eq.s32.totalorder %s56, 0
      %p439 = por %p437, %p438
      %s441 = sadd.s32 %s440, 1
      %p444 = scmp.eq.s32.totalorder %s50, 1
      %p445 = scmp.ne.s32.totalorder %s440, %s442
      %p446 = scmp.eq.s32.totalorder %s50, 0
      %p447 = por %p445, %p446
      %p448 = scmp.ne.s32.totalorder %s440, %s442
      %p449 = scmp.eq.s32.totalorder %s55, 1
      %p450 = por %p448, %p449
      %p451 = scmp.ne.s32.totalorder %s442, %s443
      %p452 = scmp.eq.s32.totalorder %s55, 0
      %p453 = por %p451, %p452
      %p454 = scmp.ne.s32.totalorder %s442, %s443
      %p455 = scmp.eq.s32.totalorder %s56, 1
      %p456 = por %p454, %p455
      %p458 = scmp.ne.s32.totalorder %s443, %s457
      %p459 = scmp.eq.s32.totalorder %s56, 0
      %p460 = por %p458, %p459
      %s461 = ssub.s32 %s50, %s57
      %p462 = scmp.eq.s32.totalorder %s461, 0
      %s464 = sadd.s32 %s463, 1
      %s465 = scalar_select %p462, %s463, %s464
      %p468 = pneg %p462
      %p469 = scmp.eq.s32.totalorder %s50, 1
      %p470 = por %p468, %p469
      %p471 = scmp.ne.s32.totalorder %s463, %s466
      %p472 = scmp.eq.s32.totalorder %s50, 0
      %p473 = por %p471, %p472
      %p474 = scmp.ne.s32.totalorder %s463, %s466
      %p475 = scmp.eq.s32.totalorder %s55, 1
      %p476 = por %p474, %p475
      %p477 = scmp.ne.s32.totalorder %s466, %s467
      %p478 = scmp.eq.s32.totalorder %s55, 0
      %p479 = por %p477, %p478
      %p480 = scmp.ne.s32.totalorder %s466, %s467
      %p481 = scmp.eq.s32.totalorder %s56, 1
      %p482 = por %p480, %p481
      %p484 = scmp.ne.s32.totalorder %s467, %s483
      %p485 = scmp.eq.s32.totalorder %s56, 0
      %p486 = por %p484, %p485
      %s487 = ssub.s32 %s50, %s57
      %p488 = scmp.eq.s32.totalorder %s487, 0
      %s490 = sadd.s32 %s489, 1
      %s491 = scalar_select %p488, %s489, %s490
      %p494 = pneg %p488
      %p495 = scmp.eq.s32.totalorder %s50, 1
      %p496 = por %p494, %p495
      %p497 = scmp.ne.s32.totalorder %s489, %s492
      %p498 = scmp.eq.s32.totalorder %s50, 0
      %p499 = por %p497, %p498
      %p500 = scmp.ne.s32.totalorder %s489, %s492
      %p501 = scmp.eq.s32.totalorder %s55, 1
      %p502 = por %p500, %p501
      %p503 = scmp.ne.s32.totalorder %s492, %s493
      %p504 = scmp.eq.s32.totalorder %s55, 0
      %p505 = por %p503, %p504
      %p506 = scmp.ne.s32.totalorder %s492, %s493
      %p507 = scmp.eq.s32.totalorder %s56, 1
      %p508 = por %p506, %p507
      %p510 = scmp.ne.s32.totalorder %s493, %s509
      %p511 = scmp.eq.s32.totalorder %s56, 0
      %p512 = por %p510, %p511
      %s513 = ssub.s32 %s50, %s57
      %p514 = scmp.eq.s32.totalorder %s513, 0
      %s516 = sadd.s32 %s515, 1
      %s517 = scalar_select %p514, %s515, %s516
      %p520 = pneg %p514
      %p521 = scmp.eq.s32.totalorder %s50, 1
      %p522 = por %p520, %p521
      %p523 = scmp.ne.s32.totalorder %s515, %s518
      %p524 = scmp.eq.s32.totalorder %s50, 0
      %p525 = por %p523, %p524
      %p526 = scmp.ne.s32.totalorder %s515, %s518
      %p527 = scmp.eq.s32.totalorder %s55, 1
      %p528 = por %p526, %p527
      %p529 = scmp.ne.s32.totalorder %s518, %s519
      %p530 = scmp.eq.s32.totalorder %s55, 0
      %p531 = por %p529, %p530
      %p532 = scmp.ne.s32.totalorder %s518, %s519
      %p533 = scmp.eq.s32.totalorder %s56, 1
      %p534 = por %p532, %p533
      %p536 = scmp.ne.s32.totalorder %s519, %s535
      %p537 = scmp.eq.s32.totalorder %s56, 0
      %p538 = por %p536, %p537
      %s539 = ssub.s32 %s50, %s57
      %p540 = scmp.eq.s32.totalorder %s539, 0
      %s542 = sadd.s32 %s541, 1
      %s543 = scalar_select %p540, %s541, %s542
      %p546 = pneg %p540
      %p547 = scmp.eq.s32.totalorder %s50, 1
      %p548 = por %p546, %p547
      %p549 = scmp.ne.s32.totalorder %s541, %s544
      %p550 = scmp.eq.s32.totalorder %s50, 0
      %p551 = por %p549, %p550
      %p552 = scmp.ne.s32.totalorder %s541, %s544
      %p553 = scmp.eq.s32.totalorder %s55, 1
      %p554 = por %p552, %p553
      %p555 = scmp.ne.s32.totalorder %s544, %s545
      %p556 = scmp.eq.s32.totalorder %s55, 0
      %p557 = por %p555, %p556
      %p558 = scmp.ne.s32.totalorder %s544, %s545
      %p559 = scmp.eq.s32.totalorder %s56, 1
      %p560 = por %p558, %p559
      %p562 = scmp.ne.s32.totalorder %s545, %s561
      %p563 = scmp.eq.s32.totalorder %s56, 0
      %p564 = por %p562, %p563
      %s565 = ssub.s32 %s50, %s57
      %p566 = scmp.eq.s32.totalorder %s565, 0
      %s568 = sadd.s32 %s567, 1
      %s569 = scalar_select %p566, %s567, %s568
      %p572 = pneg %p566
      %p573 = scmp.eq.s32.totalorder %s50, 1
      %p574 = por %p572, %p573
      %p575 = scmp.ne.s32.totalorder %s567, %s570
      %p576 = scmp.eq.s32.totalorder %s50, 0
      %p577 = por %p575, %p576
      %p578 = scmp.ne.s32.totalorder %s567, %s570
      %p579 = scmp.eq.s32.totalorder %s55, 1
      %p580 = por %p578, %p579
      %p581 = scmp.ne.s32.totalorder %s570, %s571
      %p582 = scmp.eq.s32.totalorder %s55, 0
      %p583 = por %p581, %p582
      %p584 = scmp.ne.s32.totalorder %s570, %s571
      %p585 = scmp.eq.s32.totalorder %s56, 1
      %p586 = por %p584, %p585
      %p588 = scmp.ne.s32.totalorder %s571, %s587
      %p589 = scmp.eq.s32.totalorder %s56, 0
      %p590 = por %p588, %p589
      %p591 = scmp.le.s32.totalorder 1, %s50
      %p592 = scmp.lt.s32.totalorder %s50, 3
      %p593 = pnand %p591, %p592
      %p594 = pneg %p593
      // Predicated region
      $region9: #{tpu_custom_call.1} parent=5 // pred_check
        _
      $region10: #{tpu_custom_call.1} parent=5 // pred_check_branch
        %596 = sbr.rel (%p593) target = $region12
      $region11: #{tpu_custom_call.1} parent=5 // pred_region
        %s597 = ssub.s32 %s50, 1
        // Predicated region
        $region13: #{tpu_custom_call.1} parent=11 // pred_check
          %p598 = pneg %p201
        $region14: #{tpu_custom_call.1} parent=11 // pred_check_branch
          %600 = sbr.rel (%p598) target = $region16
        $region15: #{tpu_custom_call.1} parent=11 // pred_region
          %602 = vsyncadd [#allocation10], 0
          %s604 = sshll.u32 %s5, 4
          %s605 = int_to_ptr.hbm [resolvable:$true] %s604
          %s606 = sshll.u32 [#allocation9], 4
          %s607 = int_to_ptr.vmem [resolvable:$true] %s606
          %609 = dma.hbm_to_vmem [thread:$0]  %s605, 64, %s607, [#allocation10]
        $region16: #{tpu_custom_call.1} parent=11 // pred_fallthru
          _
        // Predicated region
        $region17: #{tpu_custom_call.1} parent=11 // pred_check
          %p610 = pneg %p222
        $region18: #{tpu_custom_call.1} parent=11 // pred_check_branch
          %612 = sbr.rel (%p610) target = $region20
        $region19: #{tpu_custom_call.1} parent=11 // pred_region
          _
        $region20: #{tpu_custom_call.1} parent=11 // pred_fallthru
          _
        // Predicated region
        $region21: #{tpu_custom_call.1} parent=11 // pred_check
          %p613 = pneg %p243
        $region22: #{tpu_custom_call.1} parent=11 // pred_check_branch
          %615 = sbr.rel (%p613) target = $region24
        $region23: #{tpu_custom_call.1} parent=11 // pred_region
          %617 = vsyncadd [#allocation10], 0
          %s618 = sshll.u32 %s7, 4
          %s619 = int_to_ptr.hbm [resolvable:$true] %s618
          %s620 = sshll.u32 [#allocation11], 4
          %s621 = int_to_ptr.vmem [resolvable:$true] %s620
          %626 = dma.hbm_to_vmem [thread:$0]  %s619, 256, %s621, [#allocation10], 64, 64, 4
        $region24: #{tpu_custom_call.1} parent=11 // pred_fallthru
          _
        // Predicated region
        $region25: #{tpu_custom_call.1} parent=11 // pred_check
          %p627 = pneg %p264
        $region26: #{tpu_custom_call.1} parent=11 // pred_check_branch
          %629 = sbr.rel (%p627) target = $region28
        $region27: #{tpu_custom_call.1} parent=11 // pred_region
          %631 = vsyncadd [#allocation13], 0
          %s632 = sshll.u32 %s8, 4
          %s633 = int_to_ptr.hbm [resolvable:$true] %s632
          %s634 = sshll.u32 [#allocation12], 4
          %s635 = int_to_ptr.vmem [resolvable:$true] %s634
          %640 = dma.hbm_to_vmem [thread:$0]  %s633, 256, %s635, [#allocation13], 64, 64, 4
        $region28: #{tpu_custom_call.1} parent=11 // pred_fallthru
          _
        // Predicated region
        $region29: #{tpu_custom_call.1} parent=11 // pred_check
          %p641 = pneg %p285
        $region30: #{tpu_custom_call.1} parent=11 // pred_check_branch
          %643 = sbr.rel (%p641) target = $region32
        $region31: #{tpu_custom_call.1} parent=11 // pred_region
          %645 = vsyncadd [#allocation13], 0
          %s647 = sshll.u32 %s9, 4
          %s648 = int_to_ptr.hbm [resolvable:$true] %s647
          %s649 = sshll.u32 [#allocation14], 4
          %s650 = int_to_ptr.vmem [resolvable:$true] %s649
          %652 = dma.hbm_to_vmem [thread:$0]  %s648, 64, %s650, [#allocation13]
        $region32: #{tpu_custom_call.1} parent=11 // pred_fallthru
          _
        // Predicated region
        $region33: #{tpu_custom_call.1} parent=11 // pred_check
          %p653 = pneg %p306
        $region34: #{tpu_custom_call.1} parent=11 // pred_check_branch
          %655 = sbr.rel (%p653) target = $region36
        $region35: #{tpu_custom_call.1} parent=11 // pred_region
          %657 = vsyncadd [#allocation16], 0
          %s658 = sshll.u32 %s10, 4
          %s659 = int_to_ptr.hbm [resolvable:$true] %s658
          %s660 = sshll.u32 [#allocation15], 4
          %s661 = int_to_ptr.vmem [resolvable:$true] %s660
          %666 = dma.hbm_to_vmem [thread:$0]  %s659, 256, %s661, [#allocation16], 64, 64, 4
        $region36: #{tpu_custom_call.1} parent=11 // pred_fallthru
          _
        // Predicated region
        $region37: #{tpu_custom_call.1} parent=11 // pred_check
          %p667 = pneg %p327
        $region38: #{tpu_custom_call.1} parent=11 // pred_check_branch
          %669 = sbr.rel (%p667) target = $region40
        $region39: #{tpu_custom_call.1} parent=11 // pred_region
          %671 = vsyncadd [#allocation16], 0
          %s673 = sshll.u32 %s11, 4
          %s674 = int_to_ptr.hbm [resolvable:$true] %s673
          %s675 = sshll.u32 [#allocation17], 4
          %s676 = int_to_ptr.vmem [resolvable:$true] %s675
          %678 = dma.hbm_to_vmem [thread:$0]  %s674, 16, %s676, [#allocation16]
        $region40: #{tpu_custom_call.1} parent=11 // pred_fallthru
          _
        // Predicated region
        $region41: #{tpu_custom_call.1} parent=11 // pred_check
          %p679 = pneg %p348
        $region42: #{tpu_custom_call.1} parent=11 // pred_check_branch
          %681 = sbr.rel (%p679) target = $region44
        $region43: #{tpu_custom_call.1} parent=11 // pred_region
          _
        $region44: #{tpu_custom_call.1} parent=11 // pred_fallthru
          _
        // Predicated region
        $region45: #{tpu_custom_call.1} parent=11 // pred_check
          %p682 = pneg %p369
        $region46: #{tpu_custom_call.1} parent=11 // pred_check_branch
          %684 = sbr.rel (%p682) target = $region48
        $region47: #{tpu_custom_call.1} parent=11 // pred_region
          %686 = vsyncadd [#allocation19], 0
          %s688 = sshll.u32 %s13, 4
          %s689 = int_to_ptr.hbm [resolvable:$true] %s688
          %s690 = sshll.u32 [#allocation18], 4
          %s691 = int_to_ptr.vmem [resolvable:$true] %s690
          %693 = dma.hbm_to_vmem [thread:$0]  %s689, 16, %s691, [#allocation19]
        $region48: #{tpu_custom_call.1} parent=11 // pred_fallthru
          _
        // Predicated region
        $region49: #{tpu_custom_call.1} parent=11 // pred_check
          %p694 = pneg %p390
        $region50: #{tpu_custom_call.1} parent=11 // pred_check_branch
          %696 = sbr.rel (%p694) target = $region52
        $region51: #{tpu_custom_call.1} parent=11 // pred_region
          %698 = vsyncadd [#allocation19], 0
          %s699 = sshll.u32 %s14, 4
          %s700 = int_to_ptr.hbm [resolvable:$true] %s699
          %s701 = sshll.u32 [#allocation20], 4
          %s702 = int_to_ptr.vmem [resolvable:$true] %s701
          %707 = dma.hbm_to_vmem [thread:$0]  %s700, 256, %s702, [#allocation19], 64, 64, 4
        $region52: #{tpu_custom_call.1} parent=11 // pred_fallthru
          _
        // Predicated region
        $region53: #{tpu_custom_call.1} parent=11 // pred_check
          %p708 = pneg %p411
        $region54: #{tpu_custom_call.1} parent=11 // pred_check_branch
          %710 = sbr.rel (%p708) target = $region56
        $region55: #{tpu_custom_call.1} parent=11 // pred_region
          %712 = vsyncadd [#allocation22], 0
          %s713 = sshll.u32 %s15, 4
          %s714 = int_to_ptr.hbm [resolvable:$true] %s713
          %s715 = sshll.u32 [#allocation21], 4
          %s716 = int_to_ptr.vmem [resolvable:$true] %s715
          %721 = dma.hbm_to_vmem [thread:$0]  %s714, 256, %s716, [#allocation22], 64, 64, 4
        $region56: #{tpu_custom_call.1} parent=11 // pred_fallthru
          _
        // Predicated region
        $region57: #{tpu_custom_call.1} parent=11 // pred_check
          %p722 = pneg %p432
        $region58: #{tpu_custom_call.1} parent=11 // pred_check_branch
          %724 = sbr.rel (%p722) target = $region60
        $region59: #{tpu_custom_call.1} parent=11 // pred_region
          _
        $region60: #{tpu_custom_call.1} parent=11 // pred_fallthru
          _
        // Predicated region
        $region61: #{tpu_custom_call.1} parent=11 // pred_check
          %p725 = pneg %p453
        $region62: #{tpu_custom_call.1} parent=11 // pred_check_branch
          %727 = sbr.rel (%p725) target = $region64
        $region63: #{tpu_custom_call.1} parent=11 // pred_region
          %729 = vsyncadd [#allocation5], 0
          %s731 = sshll.u32 %s17, 4
          %s732 = int_to_ptr.vmem [resolvable:$true] %s731
          %734 = dma.vmem_to_smem %s732, 16, [#allocation23], [#allocation5]
        $region64: #{tpu_custom_call.1} parent=11 // pred_fallthru
          _
      $region12: #{tpu_custom_call.1} parent=5 // pred_fallthru
        _
      %p735 = scmp.lt.s32.totalorder %s50, 2
      // Predicated region
      $region65: #{tpu_custom_call.1} parent=5 // pred_check
        %p736 = pneg %p735
      $region66: #{tpu_custom_call.1} parent=5 // pred_check_branch
        %738 = sbr.rel (%p736) target = $region68
      $region67: #{tpu_custom_call.1} parent=5 // pred_region
        // Predicated region
        $region69: #{tpu_custom_call.1} parent=67 // pred_check
          %p739 = pneg %p70
        $region70: #{tpu_custom_call.1} parent=67 // pred_check_branch
          %741 = sbr.rel (%p739) target = $region72
        $region71: #{tpu_custom_call.1} parent=67 // pred_region
          %p742 = scmp.lt.s32.totalorder %s50, 1
          %s743 = scalar_select %p742, %s50, 1
          %s744 = smul.addr %s743, 2
          %s745 = smul.addr %s744, 8
          %s746 = scalar_lea.vmem %s0, %s745
        $region72: #{tpu_custom_call.1} parent=67 // pred_fallthru
          _
        // Predicated region
        $region73: #{tpu_custom_call.1} parent=67 // pred_check
          %p747 = pneg %p96
        $region74: #{tpu_custom_call.1} parent=67 // pred_check_branch
          %749 = sbr.rel (%p747) target = $region76
        $region75: #{tpu_custom_call.1} parent=67 // pred_region
          %p750 = scmp.lt.s32.totalorder %s50, 1
          %s751 = scalar_select %p750, %s50, 1
          %s752 = smul.addr %s751, 2
          %s753 = scalar_lea.vmem %s1, %s752
        $region76: #{tpu_custom_call.1} parent=67 // pred_fallthru
          _
        // Predicated region
        $region77: #{tpu_custom_call.1} parent=67 // pred_check
          %p754 = pneg %p122
        $region78: #{tpu_custom_call.1} parent=67 // pred_check_branch
          %756 = sbr.rel (%p754) target = $region80
        $region79: #{tpu_custom_call.1} parent=67 // pred_region
          %s757 = sand.u32 %s112, 1
          %s758 = scalar_lea.sflag [#allocation3], %s757
          %s759 = sand.u32 %s112, 1
          %s760 = smul.addr %s759, 2
          %s761 = scalar_lea.vmem [#allocation2], %s760
          %763 = vsyncadd %s758, 0
          %s764 = smul.addr %s50, 2
          %s765 = scalar_lea.hbm %s2, %s764
          %s767 = sshll.u32 %s765, 4
          %s768 = int_to_ptr.hbm [resolvable:$true] %s767
          %s769 = sshll.u32 %s761, 4
          %s770 = int_to_ptr.vmem [resolvable:$true] %s769
          %772 = dma.hbm_to_vmem [thread:$0]  %s768, 32, %s770, %s758
        $region80: #{tpu_custom_call.1} parent=67 // pred_fallthru
          _
        // Predicated region
        $region81: #{tpu_custom_call.1} parent=67 // pred_check
          %p773 = pneg %p148
        $region82: #{tpu_custom_call.1} parent=67 // pred_check_branch
          %775 = sbr.rel (%p773) target = $region84
        $region83: #{tpu_custom_call.1} parent=67 // pred_region
          %s776 = sand.u32 %s50, 1
          %s777 = scalar_lea.sflag [#allocation7], %s776
          %s778 = sand.u32 %s138, 1
          %s779 = smul.addr %s778, 2
          %s780 = scalar_lea.vmem [#allocation6], %s779
          %782 = vsyncadd %s777, 0
          %s783 = smul.addr %s50, 2
          %s784 = scalar_lea.hbm %s3, %s783
          %s786 = sshll.u32 %s784, 4
          %s787 = int_to_ptr.hbm [resolvable:$true] %s786
          %s788 = sshll.u32 %s780, 4
          %s789 = int_to_ptr.vmem [resolvable:$true] %s788
          %791 = dma.hbm_to_vmem [thread:$0]  %s787, 32, %s789, %s777
        $region84: #{tpu_custom_call.1} parent=67 // pred_fallthru
          _
        // Predicated region
        $region85: #{tpu_custom_call.1} parent=67 // pred_check
          %p792 = pneg %p174
        $region86: #{tpu_custom_call.1} parent=67 // pred_check_branch
          %794 = sbr.rel (%p792) target = $region88
        $region87: #{tpu_custom_call.1} parent=67 // pred_region
          %s795 = sand.u32 %s50, 1
          %s796 = scalar_lea.sflag [#allocation7], %s795
          %s797 = sand.u32 %s164, 1
          %s798 = smul.addr %s797, 2
          %s799 = scalar_lea.vmem [#allocation8], %s798
          %801 = vsyncadd %s796, 0
          %s802 = smul.addr %s50, 2
          %s803 = scalar_lea.hbm %s4, %s802
          %s805 = sshll.u32 %s803, 4
          %s806 = int_to_ptr.hbm [resolvable:$true] %s805
          %s807 = sshll.u32 %s799, 4
          %s808 = int_to_ptr.vmem [resolvable:$true] %s807
          %810 = dma.hbm_to_vmem [thread:$0]  %s806, 32, %s808, %s796
        $region88: #{tpu_custom_call.1} parent=67 // pred_fallthru
          _
      $region68: #{tpu_custom_call.1} parent=5 // pred_fallthru
        _
      %p811 = scmp.le.s32.totalorder 1, %s50
      %p812 = scmp.lt.s32.totalorder %s50, 3
      %p813 = pnand %p811, %p812
      %p814 = pneg %p813
      // Predicated region
      $region89: #{tpu_custom_call.1} parent=5 // pred_check
        _
      $region90: #{tpu_custom_call.1} parent=5 // pred_check_branch
        %816 = sbr.rel (%p813) target = $region92
      $region91: #{tpu_custom_call.1} parent=5 // pred_region
        %s817 = ssub.s32 %s50, 1
        %s818 = sand.u32 %s115, 1
        %s819 = scalar_lea.sflag [#allocation3], %s818
        %s820 = sand.u32 %s115, 1
        %s821 = smul.addr %s820, 2
        %s822 = scalar_lea.vmem [#allocation2], %s821
        // Predicated region
        $region93: #{tpu_custom_call.1} parent=91 // pred_check
          %p823 = pneg %p128
        $region94: #{tpu_custom_call.1} parent=91 // pred_check_branch
          %825 = sbr.rel (%p823) target = $region96
        $region95: #{tpu_custom_call.1} parent=91 // pred_region
          %827 = dma.done %s819, 32
        $region96: #{tpu_custom_call.1} parent=91 // pred_fallthru
          _
        %s828 = sand.u32 %s55, 1
        %s829 = scalar_lea.sflag [#allocation7], %s828
        %s830 = sand.u32 %s141, 1
        %s831 = smul.addr %s830, 2
        %s832 = scalar_lea.vmem [#allocation6], %s831
        // Predicated region
        $region97: #{tpu_custom_call.1} parent=91 // pred_check
          %p833 = pneg %p154
        $region98: #{tpu_custom_call.1} parent=91 // pred_check_branch
          %835 = sbr.rel (%p833) target = $region100
        $region99: #{tpu_custom_call.1} parent=91 // pred_region
          %837 = dma.done %s829, 32
        $region100: #{tpu_custom_call.1} parent=91 // pred_fallthru
          _
        %s838 = sand.u32 %s55, 1
        %s839 = scalar_lea.sflag [#allocation7], %s838
        %s840 = sand.u32 %s167, 1
        %s841 = smul.addr %s840, 2
        %s842 = scalar_lea.vmem [#allocation8], %s841
        // Predicated region
        $region101: #{tpu_custom_call.1} parent=91 // pred_check
          %p843 = pneg %p180
        $region102: #{tpu_custom_call.1} parent=91 // pred_check_branch
          %845 = sbr.rel (%p843) target = $region104
        $region103: #{tpu_custom_call.1} parent=91 // pred_region
          %847 = dma.done %s839, 32
        $region104: #{tpu_custom_call.1} parent=91 // pred_fallthru
          _
        // Predicated region
        $region105: #{tpu_custom_call.1} parent=91 // pred_check
          %p848 = pneg %p201
        $region106: #{tpu_custom_call.1} parent=91 // pred_check_branch
          %850 = sbr.rel (%p848) target = $region108
        $region107: #{tpu_custom_call.1} parent=91 // pred_region
          %852 = dma.done [#allocation10], 64
        $region108: #{tpu_custom_call.1} parent=91 // pred_fallthru
          _
        // Predicated region
        $region109: #{tpu_custom_call.1} parent=91 // pred_check
          %p853 = pneg %p243
        $region110: #{tpu_custom_call.1} parent=91 // pred_check_branch
          %855 = sbr.rel (%p853) target = $region112
        $region111: #{tpu_custom_call.1} parent=91 // pred_region
          %857 = dma.done [#allocation10], 256
        $region112: #{tpu_custom_call.1} parent=91 // pred_fallthru
          _
        // Predicated region
        $region113: #{tpu_custom_call.1} parent=91 // pred_check
          %p858 = pneg %p264
        $region114: #{tpu_custom_call.1} parent=91 // pred_check_branch
          %860 = sbr.rel (%p858) target = $region116
        $region115: #{tpu_custom_call.1} parent=91 // pred_region
          %862 = dma.done [#allocation13], 256
        $region116: #{tpu_custom_call.1} parent=91 // pred_fallthru
          _
        // Predicated region
        $region117: #{tpu_custom_call.1} parent=91 // pred_check
          %p863 = pneg %p285
        $region118: #{tpu_custom_call.1} parent=91 // pred_check_branch
          %865 = sbr.rel (%p863) target = $region120
        $region119: #{tpu_custom_call.1} parent=91 // pred_region
          %867 = dma.done [#allocation13], 64
        $region120: #{tpu_custom_call.1} parent=91 // pred_fallthru
          _
        // Predicated region
        $region121: #{tpu_custom_call.1} parent=91 // pred_check
          %p868 = pneg %p306
        $region122: #{tpu_custom_call.1} parent=91 // pred_check_branch
          %870 = sbr.rel (%p868) target = $region124
        $region123: #{tpu_custom_call.1} parent=91 // pred_region
          %872 = dma.done [#allocation16], 256
        $region124: #{tpu_custom_call.1} parent=91 // pred_fallthru
          _
        // Predicated region
        $region125: #{tpu_custom_call.1} parent=91 // pred_check
          %p873 = pneg %p327
        $region126: #{tpu_custom_call.1} parent=91 // pred_check_branch
          %875 = sbr.rel (%p873) target = $region128
        $region127: #{tpu_custom_call.1} parent=91 // pred_region
          %877 = dma.done [#allocation16], 16
        $region128: #{tpu_custom_call.1} parent=91 // pred_fallthru
          _
        // Predicated region
        $region129: #{tpu_custom_call.1} parent=91 // pred_check
          %p878 = pneg %p369
        $region130: #{tpu_custom_call.1} parent=91 // pred_check_branch
          %880 = sbr.rel (%p878) target = $region132
        $region131: #{tpu_custom_call.1} parent=91 // pred_region
          %882 = dma.done [#allocation19], 16
        $region132: #{tpu_custom_call.1} parent=91 // pred_fallthru
          _
        // Predicated region
        $region133: #{tpu_custom_call.1} parent=91 // pred_check
          %p883 = pneg %p390
        $region134: #{tpu_custom_call.1} parent=91 // pred_check_branch
          %885 = sbr.rel (%p883) target = $region136
        $region135: #{tpu_custom_call.1} parent=91 // pred_region
          %887 = dma.done [#allocation19], 256
        $region136: #{tpu_custom_call.1} parent=91 // pred_fallthru
          _
        // Predicated region
        $region137: #{tpu_custom_call.1} parent=91 // pred_check
          %p888 = pneg %p411
        $region138: #{tpu_custom_call.1} parent=91 // pred_check_branch
          %890 = sbr.rel (%p888) target = $region140
        $region139: #{tpu_custom_call.1} parent=91 // pred_region
          %892 = dma.done [#allocation22], 256
        $region140: #{tpu_custom_call.1} parent=91 // pred_fallthru
          _
        // Predicated region
        $region141: #{tpu_custom_call.1} parent=91 // pred_check
          %p893 = pneg %p453
        $region142: #{tpu_custom_call.1} parent=91 // pred_check_branch
          %895 = sbr.rel (%p893) target = $region144
        $region143: #{tpu_custom_call.1} parent=91 // pred_region
          %897 = dma.done [#allocation5], 16
        $region144: #{tpu_custom_call.1} parent=91 // pred_fallthru
          _
        %898 = sfence
        %p899 = scmp.lt.s32.totalorder %s55, 1
        %s900 = scalar_select %p899, %s55, 1
        %s901 = smul.addr %s900, 2
        %s902 = smul.addr %s901, 8
        %s903 = scalar_lea.vmem %s0, %s902
        %p904 = pneg %p76
        %p905 = pneg %p73
        %p906 = scmp.lt.s32.totalorder %s55, 1
        %s907 = scalar_select %p906, %s55, 1
        %s908 = smul.addr %s907, 2
        %s909 = scalar_lea.vmem %s1, %s908
        %p910 = pneg %p102
        %p911 = pneg %p99
        %s912 = sand.u32 %s115, 1
        %s913 = scalar_lea.sflag [#allocation3], %s912
        %s914 = sand.u32 %s115, 1
        %s915 = smul.addr %s914, 2
        %s916 = scalar_lea.vmem [#allocation2], %s915
        %p917 = pneg %p128
        %p918 = pneg %p125
        %s919 = sand.u32 %s55, 1
        %s920 = scalar_lea.sflag [#allocation7], %s919
        %s921 = sand.u32 %s141, 1
        %s922 = smul.addr %s921, 2
        %s923 = scalar_lea.vmem [#allocation6], %s922
        %p924 = pneg %p154
        %p925 = pneg %p151
        %s926 = sand.u32 %s55, 1
        %s927 = scalar_lea.sflag [#allocation7], %s926
        %s928 = sand.u32 %s167, 1
        %s929 = smul.addr %s928, 2
        %s930 = scalar_lea.vmem [#allocation8], %s929
        %p931 = pneg %p180
        %p932 = pneg %p177
        %p933 = pneg %p201
        %p934 = pneg %p198
        %p935 = pneg %p222
        %p936 = pneg %p219
        %p937 = pneg %p243
        %p938 = pneg %p240
        %p939 = pneg %p264
        %p940 = pneg %p261
        %p941 = pneg %p285
        %p942 = pneg %p282
        %p943 = pneg %p306
        %p944 = pneg %p303
        %p945 = pneg %p327
        %p946 = pneg %p324
        %p947 = pneg %p348
        %p948 = pneg %p345
        %p949 = pneg %p369
        %p950 = pneg %p366
        %p951 = pneg %p390
        %p952 = pneg %p387
        %p953 = pneg %p411
        %p954 = pneg %p408
        %p955 = pneg %p432
        %p956 = pneg %p429
        %p957 = pneg %p453
        %p958 = pneg %p450
        %p959 = pneg %p479
        %p960 = pneg %p476
        %s961 = sand.u32 %s466, 1
        %s962 = scalar_lea.sflag [#allocation4], %s961
        %s963 = sand.u32 %s466, 1
        %s964 = smul.addr %s963, 2
        %s965 = scalar_lea.vmem [#allocation24], %s964
        %p966 = pneg %p505
        %p967 = pneg %p502
        %p968 = scmp.lt.s32.totalorder %s55, 1
        %s969 = scalar_select %p968, %s55, 1
        %s970 = smul.addr %s969, 2
        %s971 = scalar_lea.vmem %s19, %s970
        %p972 = pneg %p531
        %p973 = pneg %p528
        %s974 = sand.u32 %s55, 1
        %s975 = scalar_lea.sflag [#allocation26], %s974
        %s976 = sand.u32 %s518, 1
        %s977 = smul.addr %s976, 2
        %s978 = scalar_lea.vmem [#allocation25], %s977
        %p979 = pneg %p557
        %p980 = pneg %p554
        %s981 = sand.u32 %s55, 1
        %s982 = scalar_lea.sflag [#allocation26], %s981
        %s983 = sand.u32 %s544, 1
        %s984 = smul.addr %s983, 2
        %s985 = scalar_lea.vmem [#allocation27], %s984
        %p986 = pneg %p583
        %p987 = pneg %p580
        %s988 = sand.u32 %s570, 1
        %s989 = scalar_lea.sflag [#allocation29], %s988
        %s990 = sand.u32 %s570, 1
        %s991 = smul.addr %s990, 2
        %s992 = scalar_lea.vmem [#allocation28], %s991
        %p993 = scmp.lt.s32.totalorder %s55, 1
        %s994 = scalar_select %p993, %s55, 1
        %s995 = smul.addr %s994, 2
        %s996 = smul.addr %s995, 8
        %s997 = scalar_lea.vmem %s0, %s996
        %p998 = scmp.lt.s32.totalorder %s55, 1
        %s999 = scalar_select %p998, %s55, 1
        %s1000 = smul.addr %s999, 2
        %s1001 = scalar_lea.vmem %s1, %s1000
        %p1002 = scmp.lt.s32.totalorder %s55, 1
        %s1003 = scalar_select %p1002, %s55, 1
        %s1004 = smul.addr %s1003, 2
        %s1005 = scalar_lea.vmem %s19, %s1004
        %v1007 = vld [vmem:[%s997] sm:$0xff]
        %v1008 = vld [vmem:[%s997 + $0x8] sm:$0x3]
        %v1009 = vpack.c.bf16 %v1008, %v1007
        %v1010 = vld [vmem:[#allocation9] sm:$0x7]
        %vm1011 = vcmask 48128
        %v1013 = vsel %vm1011, %v1009, 0
        %vm1015 = vcmask 1042432
        %v1017 = vsel %vm1015, %v1010, 0
        %1019 = vmatpush.bf16.msra.mxu0 0
        %1020 = vmatpush.bf16.msra.mxu0 0
        %1021 = vmatpush.bf16.msra.mxu0 0
        %1022 = vmatpush.bf16.msra.mxu0 0
        %1023 = vmatpush.bf16.msra.mxu0 0
        %1024 = vmatpush.bf16.msra.mxu0 0
        %1025 = vmatpush.bf16.msra.mxu0 0
        %1026 = vmatpush.bf16.msra.mxu0 %v1017
        %1027 = vmatmul.bf16.gmra.mxu0 %v1013
        %v1028 = vpop.f32.mrf.mxu0
        %v1029 = vadd.f32 0.0, %v1028
        %v1030 = vpop.f32.mrf.mxu0
        %v1031 = vadd.f32 0.0, %v1030
        %1032 = vdwg.mxu0
        %v1033 = vpack.c.bf16 %v1031, %v1029
        %v1034 = vld [vmem:[%s6] sm:$0xf]
        %v1035 = vld [vmem:[%s6 + $0x4] sm:$0xf]
        %v1036 = vld [vmem:[%s6 + $0x8] sm:$0xf]
        %v1037 = vld [vmem:[%s6 + $0xc] sm:$0xf]
        %v1038 = vld [vmem:[#allocation14] sm:$0x1]
        %v1039 = vperm.slane %v1038, 0
        %v1044 = vunpack.c.l.b16 %v1034
        %v1045 = vunpack.c.l.b16 %v1035
        %v1046 = vunpack.c.l.b16 %v1036
        %v1047 = vunpack.c.l.b16 %v1037
        %v1048 = vpack.c.b16 %v1045, %v1044
        %v1049 = vpack.c.b16 %v1047, %v1046
        %vm1052 = vcmask 261120
        %v1054 = vsel %vm1052, %v1033, 0
        %1056 = vmatpush.bf16.msra.mxu0 0
        %1057 = vmatpush.bf16.msra.mxu0 0
        %1058 = vmatpush.bf16.msra.mxu0 0
        %1059 = vmatpush.bf16.msra.mxu0 0
        %1060 = vmatpush.bf16.msra.mxu0 0
        %1061 = vmatpush.bf16.msra.mxu0 0
        %1062 = vmatpush.bf16.msra.mxu0 %v1049
        %1063 = vmatpush.bf16.msra.mxu0 %v1048
        %1064 = vmatmul.bf16.gmra.mxu0 %v1054
        %v1065 = vpop.f32.mrf.mxu0
        %v1066 = vadd.f32 %v1039, %v1065
        %v1067 = vpop.f32.mrf.mxu0
        %v1068 = vadd.f32 %v1039, %v1067
        %1069 = vdwg.mxu0
        %s1070 = sld [smem:[#allocation23]]
        %v1071 = vstv %s1070
        %v1072 = vmul.f32 %v1071, %v1066
        %v1073 = vmul.f32 %v1071, %v1068
        %s1074 = ssub.f32 1.0, %s1070
        %v1075 = vmax.f32 %v1066, 0.0
        %v1076 = vmax.f32 %v1068, 0.0
        %v1077 = vstv %s1074
        %v1078 = vmul.f32 %v1077, %v1075
        %v1079 = vmul.f32 %v1077, %v1076
        %1082 = vrot.lane.b32.xlu0 %v1078, 96
        %v1083 = vpop.permute.xlu0 %1082
        %1084 = vrot.lane.b32.xlu0 %v1079, 96
        %v1085 = vpop.permute.xlu0 %1084
        %v1088 = vadd.f32 %v1072, %v1083
        %v1089 = vadd.f32 %v1073, %v1085
        %v1090 = vpack.c.bf16 %v1089, %v1088
        %v1091 = vld [vmem:[#allocation11] sm:$0xf]
        %v1092 = vld [vmem:[#allocation11 + $0x4] sm:$0xf]
        %v1093 = vld [vmem:[#allocation11 + $0x8] sm:$0xf]
        %v1094 = vld [vmem:[#allocation11 + $0xc] sm:$0xf]
        %v1095 = vld [vmem:[#allocation14 + $0x1] sm:$0x1]
        %v1096 = vperm.slane %v1095, 0
        %v1101 = vunpack.c.l.b16 %v1091
        %v1102 = vunpack.c.l.b16 %v1092
        %v1103 = vunpack.c.l.b16 %v1093
        %v1104 = vunpack.c.l.b16 %v1094
        %v1105 = vpack.c.b16 %v1102, %v1101
        %v1106 = vpack.c.b16 %v1104, %v1103
        %v1110 = vsel %vm1052, %v1090, 0
        %1112 = vmatpush.bf16.msra.mxu0 0
        %1113 = vmatpush.bf16.msra.mxu0 0
        %1114 = vmatpush.bf16.msra.mxu0 0
        %1115 = vmatpush.bf16.msra.mxu0 0
        %1116 = vmatpush.bf16.msra.mxu0 0
        %1117 = vmatpush.bf16.msra.mxu0 0
        %1118 = vmatpush.bf16.msra.mxu0 %v1106
        %1119 = vmatpush.bf16.msra.mxu0 %v1105
        %1120 = vmatmul.bf16.gmra.mxu0 %v1110
        %v1121 = vpop.f32.mrf.mxu0
        %v1122 = vadd.f32 %v1096, %v1121
        %v1123 = vpop.f32.mrf.mxu0
        %v1124 = vadd.f32 %v1096, %v1123
        %1125 = vdwg.mxu0
        %s1126 = sld [smem:[#allocation23 + $0x1]]
        %v1127 = vstv %s1126
        %v1128 = vmul.f32 %v1127, %v1122
        %v1129 = vmul.f32 %v1127, %v1124
        %s1130 = ssub.f32 1.0, %s1126
        %v1131 = vmax.f32 %v1122, 0.0
        %v1132 = vmax.f32 %v1124, 0.0
        %v1133 = vstv %s1130
        %v1134 = vmul.f32 %v1133, %v1131
        %v1135 = vmul.f32 %v1133, %v1132
        %1138 = vrot.lane.b32.xlu0 %v1134, 96
        %v1139 = vpop.permute.xlu0 %1138
        %1140 = vrot.lane.b32.xlu0 %v1135, 96
        %v1141 = vpop.permute.xlu0 %1140
        %v1144 = vadd.f32 %v1128, %v1139
        %v1145 = vadd.f32 %v1129, %v1141
        %v1146 = vpack.c.bf16 %v1145, %v1144
        %v1147 = vld [vmem:[#allocation12] sm:$0xf]
        %v1148 = vld [vmem:[#allocation12 + $0x4] sm:$0xf]
        %v1149 = vld [vmem:[#allocation12 + $0x8] sm:$0xf]
        %v1150 = vld [vmem:[#allocation12 + $0xc] sm:$0xf]
        %v1151 = vld [vmem:[#allocation14 + $0x2] sm:$0x1]
        %v1152 = vperm.slane %v1151, 0
        %v1157 = vunpack.c.l.b16 %v1147
        %v1158 = vunpack.c.l.b16 %v1148
        %v1159 = vunpack.c.l.b16 %v1149
        %v1160 = vunpack.c.l.b16 %v1150
        %v1161 = vpack.c.b16 %v1158, %v1157
        %v1162 = vpack.c.b16 %v1160, %v1159
        %v1166 = vsel %vm1052, %v1146, 0
        %1168 = vmatpush.bf16.msra.mxu0 0
        %1169 = vmatpush.bf16.msra.mxu0 0
        %1170 = vmatpush.bf16.msra.mxu0 0
        %1171 = vmatpush.bf16.msra.mxu0 0
        %1172 = vmatpush.bf16.msra.mxu0 0
        %1173 = vmatpush.bf16.msra.mxu0 0
        %1174 = vmatpush.bf16.msra.mxu0 %v1162
        %1175 = vmatpush.bf16.msra.mxu0 %v1161
        %1176 = vmatmul.bf16.gmra.mxu0 %v1166
        %v1177 = vpop.f32.mrf.mxu0
        %v1178 = vadd.f32 %v1152, %v1177
        %v1179 = vpop.f32.mrf.mxu0
        %v1180 = vadd.f32 %v1152, %v1179
        %1181 = vdwg.mxu0
        %s1182 = sld [smem:[#allocation23 + $0x2]]
        %v1183 = vstv %s1182
        %v1184 = vmul.f32 %v1183, %v1178
        %v1185 = vmul.f32 %v1183, %v1180
        %s1186 = ssub.f32 1.0, %s1182
        %v1187 = vmax.f32 %v1178, 0.0
        %v1188 = vmax.f32 %v1180, 0.0
        %v1189 = vstv %s1186
        %v1190 = vmul.f32 %v1189, %v1187
        %v1191 = vmul.f32 %v1189, %v1188
        %1194 = vrot.lane.b32.xlu0 %v1190, 96
        %v1195 = vpop.permute.xlu0 %1194
        %1196 = vrot.lane.b32.xlu0 %v1191, 96
        %v1197 = vpop.permute.xlu0 %1196
        %v1200 = vadd.f32 %v1184, %v1195
        %v1201 = vadd.f32 %v1185, %v1197
        %v1202 = vpack.c.bf16 %v1201, %v1200
        %v1203 = vld [vmem:[#allocation15] sm:$0xf]
        %v1204 = vld [vmem:[#allocation15 + $0x4] sm:$0xf]
        %v1205 = vld [vmem:[#allocation15 + $0x8] sm:$0xf]
        %v1206 = vld [vmem:[#allocation15 + $0xc] sm:$0xf]
        %v1207 = vld [vmem:[#allocation17] sm:$0x1]
        %v1209 = vperm.slane %v1207, 0
        %v1215 = vunpack.c.l.b16 %v1203
        %v1216 = vunpack.c.l.b16 %v1204
        %v1217 = vunpack.c.l.b16 %v1205
        %v1218 = vunpack.c.l.b16 %v1206
        %v1219 = vpack.c.b16 %v1216, %v1215
        %v1220 = vpack.c.b16 %v1218, %v1217
        %v1224 = vsel %vm1052, %v1202, 0
        %1226 = vmatpush.bf16.msra.mxu0 0
        %1227 = vmatpush.bf16.msra.mxu0 0
        %1228 = vmatpush.bf16.msra.mxu0 0
        %1229 = vmatpush.bf16.msra.mxu0 0
        %1230 = vmatpush.bf16.msra.mxu0 0
        %1231 = vmatpush.bf16.msra.mxu0 0
        %1232 = vmatpush.bf16.msra.mxu0 %v1220
        %1233 = vmatpush.bf16.msra.mxu0 %v1219
        %1234 = vmatmul.bf16.gmra.mxu0 %v1224
        %v1235 = vpop.f32.mrf.mxu0
        %v1236 = vadd.f32 %v1209, %v1235
        %v1237 = vpop.f32.mrf.mxu0
        %v1238 = vadd.f32 %v1209, %v1237
        %1239 = vdwg.mxu0
        %v1240 = vld [vmem:[%s1001] sm:$0x3]
        %v1241 = vld [vmem:[%s822] sm:$0x3]
        %v1242 = vld [vmem:[%s832] sm:$0x3]
        %1244 = vrot.lane.b32.xlu0 %v1241, 32
        %v1245 = vpop.permute.xlu0 %1244
        %v1247 = vsel %vm1052, %v1240, %v1245
        %v1248 = vpack.c.bf16 %v1247, %v1247
        %v1249 = vld [vmem:[%s12] sm:$0xf]
        %v1250 = vld [vmem:[%s12 + $0x4] sm:$0xf]
        %v1251 = vld [vmem:[%s12 + $0x8] sm:$0xf]
        %v1252 = vld [vmem:[%s12 + $0xc] sm:$0xf]
        %v1253 = vld [vmem:[%s12 + $0x10] sm:$0xf]
        %v1254 = vld [vmem:[%s12 + $0x14] sm:$0xf]
        %v1255 = vld [vmem:[%s12 + $0x18] sm:$0xf]
        %v1256 = vld [vmem:[%s12 + $0x1c] sm:$0xf]
        %v1257 = vld [vmem:[#allocation18] sm:$0x1]
        %v1259 = vperm.slane %v1257, 0
        %v1269 = vunpack.c.l.b16 %v1249
        %v1270 = vunpack.c.l.b16 %v1250
        %v1271 = vunpack.c.l.b16 %v1251
        %v1272 = vunpack.c.l.b16 %v1252
        %v1273 = vunpack.c.l.b16 %v1253
        %v1274 = vunpack.c.l.b16 %v1254
        %v1275 = vunpack.c.l.b16 %v1255
        %v1276 = vunpack.c.l.b16 %v1256
        %v1277 = vpack.c.b16 %v1270, %v1269
        %v1278 = vpack.c.b16 %v1272, %v1271
        %v1279 = vpack.c.b16 %v1274, %v1273
        %v1280 = vpack.c.b16 %v1276, %v1275
        %vm1285 = vcmask 523264
        %v1287 = vsel %vm1285, %v1248, 0
        %1289 = vmatpush.bf16.msra.mxu0 0
        %1290 = vmatpush.bf16.msra.mxu0 0
        %1291 = vmatpush.bf16.msra.mxu0 0
        %1292 = vmatpush.bf16.msra.mxu0 0
        %1293 = vmatpush.bf16.msra.mxu0 %v1280
        %1294 = vmatpush.bf16.msra.mxu0 %v1279
        %1295 = vmatpush.bf16.msra.mxu0 %v1278
        %1296 = vmatpush.bf16.msra.mxu0 %v1277
        %1297 = vmatmul.bf16.gmra.mxu0 %v1287
        %v1298 = vpop.f32.mrf.mxu0
        %v1299 = vadd.f32 %v1259, %v1298
        %v1300 = vpop.f32.mrf.mxu0
        %1301 = vdwg.mxu0
        %v1302 = vxor.u32 %v1299, 2147483648
        %v1303 = vmul.f32 %v1302, 1.442695
        %v1304 = vpow.pop %v1303
        %v1305 = vadd.f32 %v1304, 1.0
        %v1306 = vrcp.pop %v1305
        %v1307 = vmul.f32 %v1305, %v1306
        %v1308 = vsub.f32 1.0, %v1307
        %v1309 = vmul.f32 %v1306, %v1308
        %v1310 = vadd.f32 %v1306, %v1309
        %vm1311 = vweird.f32 %v1305
        %vm1312 = vweird.f32 %v1306
        %vm1313 = vmor %vm1311, %vm1312
        %v1314 = vsel %vm1313, %v1306, %v1310
        %v1315 = vand.u32 2147483647, %v1305
        %vm1316 = vcmp.eq.f32.partialorder %v1315, 8.507059e+37
        %v1317 = vand.u32 %v1305, 2147483648
        %v1318 = vor.u32 1.1754944e-38, %v1317
        %v1319 = vsel %vm1316, %v1318, %v1314
        %v1320 = vmul.f32 1.0, %v1319
        %v1321 = vtanh.pop %v1299
        %1323 = vrot.lane.b32.xlu0 %v1242, 32
        %v1324 = vpop.permute.xlu0 %1323
        %v1326 = vmul.f32 %v1320, %v1324
        %1328 = vrot.lane.b32.xlu0 %v1321, 64
        %v1329 = vpop.permute.xlu0 %1328
        %v1331 = vmul.f32 %v1320, %v1329
        %1333 = vrot.lane.b32.xlu0 %v1331, 32
        %v1334 = vpop.permute.xlu0 %1333
        %v1336 = vadd.f32 %v1326, %v1334
        %v1337 = vtanh.pop %v1336
        %1339 = vrot.lane.b32.xlu0 %v1337, 64
        %v1340 = vpop.permute.xlu0 %1339
        %v1342 = vmul.f32 %v1320, %v1340
        %1344 = vrot.lane.b32.xlu0 %v1342, 32
        %v1345 = vpop.permute.xlu0 %1344
        %vm1347 = vcmask 254976
        %1348 = vst.msk [vmem:[%s978] sm:$0x3] %vm1347, %v1345
        %1350 = vrot.lane.b32.xlu0 %v1336, 96
        %v1351 = vpop.permute.xlu0 %1350
        %1353 = vst.msk [vmem:[%s985] sm:$0x3] %vm1347, %v1351
        %v1354 = vld [vmem:[%s842] sm:$0x3]
        %v1355 = vld [vmem:[%s16] sm:$0x1]
        %v1356 = vld [vmem:[%s16 + $0x1] sm:$0x1]
        %v1357 = vld [vmem:[%s16 + $0x2] sm:$0x1]
        %v1358 = vld [vmem:[%s16 + $0x3] sm:$0x1]
        %v1359 = vpack.c.bf16 %v1342, %v1342
        %v1360 = vld [vmem:[#allocation20] sm:$0xf]
        %v1361 = vld [vmem:[#allocation20 + $0x4] sm:$0xf]
        %v1362 = vld [vmem:[#allocation20 + $0x8] sm:$0xf]
        %v1363 = vld [vmem:[#allocation20 + $0xc] sm:$0xf]
        %v1364 = vperm.slane %v1355, 0
        %1366 = vrot.lane.b32.xlu0 %v1359, 32
        %v1367 = vpop.permute.xlu0 %1366
        %v1372 = vunpack.c.l.b16 %v1360
        %v1373 = vunpack.c.l.b16 %v1361
        %v1374 = vunpack.c.l.b16 %v1362
        %v1375 = vunpack.c.l.b16 %v1363
        %v1376 = vpack.c.b16 %v1373, %v1372
        %v1377 = vpack.c.b16 %v1375, %v1374
        %v1381 = vsel %vm1052, %v1367, 0
        %1383 = vmatpush.bf16.msra.mxu0 0
        %1384 = vmatpush.bf16.msra.mxu0 0
        %1385 = vmatpush.bf16.msra.mxu0 0
        %1386 = vmatpush.bf16.msra.mxu0 0
        %1387 = vmatpush.bf16.msra.mxu0 0
        %1388 = vmatpush.bf16.msra.mxu0 0
        %1389 = vmatpush.bf16.msra.mxu0 %v1377
        %1390 = vmatpush.bf16.msra.mxu0 %v1376
        %1391 = vmatmul.bf16.gmra.mxu0 %v1381
        %v1392 = vpop.f32.mrf.mxu0
        %v1393 = vadd.f32 %v1364, %v1392
        %v1394 = vpop.f32.mrf.mxu0
        %1395 = vdwg.mxu0
        %v1397 = vrot.slane %v1393, 1
        %v1398 = vperm.slane %v1393, 0
        %v1399 = vperm.slane %v1397, 0
        %v1402 = vadd.f32 %v1398, %v1236
        %v1403 = vadd.f32 %v1398, %v1238
        %v1404 = vadd.f32 %v1399, %v1236
        %v1405 = vadd.f32 %v1399, %v1238
        %v1406 = vtanh.pop %v1402
        %v1407 = vtanh.pop %v1403
        %v1408 = vtanh.pop %v1404
        %v1409 = vtanh.pop %v1405
        %v1410 = vperm.slane %v1356, 0
        %v1411 = vmul.f32 %v1410, %v1406
        %v1412 = vmul.f32 %v1410, %v1407
        %v1413 = vmul.f32 %v1410, %v1408
        %v1414 = vmul.f32 %v1410, %v1409
        %v1415 = vsel %vm1052, %v1411, 0.0
        %1416 = vadd.xlane.f32.xlu0 %v1415
        %v1417 = vpop.xlane.xlu0 %1416
        %v1418 = vsel %vm1347, %v1412, 0.0
        %1419 = vadd.xlane.f32.xlu0 %v1418
        %v1420 = vpop.xlane.xlu0 %1419
        %v1421 = vsel %vm1052, %v1413, 0.0
        %1422 = vadd.xlane.f32.xlu0 %v1421
        %v1423 = vpop.xlane.xlu0 %1422
        %v1424 = vsel %vm1347, %v1414, 0.0
        %1425 = vadd.xlane.f32.xlu0 %v1424
        %v1426 = vpop.xlane.xlu0 %1425
        %vm1427 = vcmp.gt.f32.partialorder %v1354, 0.5
        %v1432 = vlaneseq
        %v1433 = vand.u32 %v1432, 127
        %v1434 = vperm.slane %v1417, %v1433
        %v1435 = vadd.s32 %v1433, 4294967288
        %v1436 = vperm.slane %v1420, %v1435
        %vm1437 = vcmask 130112
        %v1438 = vsel %vm1437, %v1436, %v1434
        %v1439 = vperm.slane %v1423, %v1433
        %v1440 = vperm.slane %v1426, %v1435
        %v1441 = vsel %vm1437, %v1440, %v1439
        %vm1442 = vcmask 1041409
        %v1443 = vsel %vm1442, %v1441, %v1438
        %v1445 = vsel %vm1427, -1e+30, %v1443
        %vm1446 = vcmask 74752
        %v1447 = vsel %vm1446, %v1445, -inf
        %1448 = vmax.xlane.f32.xlu0 %v1447
        %v1449 = vpop.xlane.xlu0 %1448
        %v1450 = vsub.f32 %v1445, %v1449
        %v1451 = vmul.f32 %v1450, 1.442695
        %v1452 = vpow.pop %v1451
        %v1453 = vsel %vm1446, %v1452, 0.0
        %1454 = vadd.xlane.f32.xlu0 %v1453
        %v1455 = vpop.xlane.xlu0 %1454
        %v1456 = vrcp.pop %v1455
        %v1457 = vmul.f32 %v1455, %v1456
        %v1458 = vsub.f32 1.0, %v1457
        %v1459 = vmul.f32 %v1456, %v1458
        %v1460 = vadd.f32 %v1456, %v1459
        %vm1461 = vweird.f32 %v1455
        %vm1462 = vweird.f32 %v1456
        %vm1463 = vmor %vm1461, %vm1462
        %v1464 = vsel %vm1463, %v1456, %v1460
        %v1465 = vand.u32 2147483647, %v1455
        %vm1466 = vcmp.eq.f32.partialorder %v1465, 8.507059e+37
        %v1467 = vand.u32 %v1455, 2147483648
        %v1468 = vor.u32 1.1754944e-38, %v1467
        %v1469 = vsel %vm1466, %v1468, %v1464
        %v1470 = vmul.f32 %v1452, %v1469
        %vm1471 = vcmask 80896
        %v1473 = vsel %vm1471, %v1470, 0
        %vm1475 = vcmask 1041408
        %v1477 = vsel %vm1475, %v1238, 0
        %1479 = vmatpush.msra.mxu0 0.0
        %1480 = vmatpush.msra.mxu0 0.0
        %1481 = vmatpush.msra.mxu0 0.0
        %1482 = vmatpush.msra.mxu0 0.0
        %1483 = vmatpush.msra.mxu0 0.0
        %1484 = vmatpush.msra.mxu0 0.0
        %1485 = vmatpush.msra.mxu0 0.0
        %1486 = vmatpush.msra.mxu0 0.0
        %1487 = vmatpush.msra.mxu0 0.0
        %1488 = vmatpush.msra.mxu0 0.0
        %1489 = vmatpush.msra.mxu0 0.0
        %1490 = vmatpush.msra.mxu0 0.0
        %1491 = vmatpush.msra.mxu0 0.0
        %1492 = vmatpush.msra.mxu0 0.0
        %1493 = vmatpush.msra.mxu0 %v1477
        %1494 = vmatpush.msra.mxu0 %v1236
        %1495 = vmatmul.f32.gmra.mxu0 %v1473
        %v1496 = vpop.f32.mrf.mxu0
        %v1497 = vadd.f32 0.0, %v1496
        %1498 = vdwg.mxu0
        %v1499 = vpack.c.bf16 %v1497, %v1497
        %v1500 = vld [vmem:[#allocation21] sm:$0xf]
        %v1501 = vld [vmem:[#allocation21 + $0x4] sm:$0xf]
        %v1502 = vld [vmem:[#allocation21 + $0x8] sm:$0xf]
        %v1503 = vld [vmem:[#allocation21 + $0xc] sm:$0xf]
        %v1504 = vperm.slane %v1357, 0
        %v1509 = vunpack.c.l.b16 %v1500
        %v1510 = vunpack.c.l.b16 %v1501
        %v1511 = vunpack.c.l.b16 %v1502
        %v1512 = vunpack.c.l.b16 %v1503
        %v1513 = vpack.c.b16 %v1510, %v1509
        %v1514 = vpack.c.b16 %v1512, %v1511
        %v1518 = vsel %vm1052, %v1499, 0
        %1520 = vmatpush.bf16.msra.mxu0 0
        %1521 = vmatpush.bf16.msra.mxu0 0
        %1522 = vmatpush.bf16.msra.mxu0 0
        %1523 = vmatpush.bf16.msra.mxu0 0
        %1524 = vmatpush.bf16.msra.mxu0 0
        %1525 = vmatpush.bf16.msra.mxu0 0
        %1526 = vmatpush.bf16.msra.mxu0 %v1514
        %1527 = vmatpush.bf16.msra.mxu0 %v1513
        %1528 = vmatmul.bf16.gmra.mxu0 %v1518
        %v1529 = vpop.f32.mrf.mxu0
        %v1530 = vadd.f32 %v1504, %v1529
        %v1531 = vpop.f32.mrf.mxu0
        %1532 = vdwg.mxu0
        %v1534 = vrot.slane %v1530, 1
        %v1535 = vperm.slane %v1530, 0
        %v1536 = vperm.slane %v1534, 0
        %1540 = vrot.lane.b32.xlu0 %v1236, 96
        %v1541 = vpop.permute.xlu0 %1540
        %1542 = vrot.lane.b32.xlu0 %v1238, 96
        %v1543 = vpop.permute.xlu0 %1542
        %v1546 = vadd.f32 %v1535, %v1541
        %v1547 = vadd.f32 %v1535, %v1543
        %v1548 = vadd.f32 %v1536, %v1541
        %v1549 = vadd.f32 %v1536, %v1543
        %v1550 = vtanh.pop %v1546
        %v1551 = vtanh.pop %v1547
        %v1552 = vtanh.pop %v1548
        %v1553 = vtanh.pop %v1549
        %v1554 = vperm.slane %v1358, 0
        %v1555 = vmul.f32 %v1554, %v1550
        %v1556 = vmul.f32 %v1554, %v1551
        %v1557 = vmul.f32 %v1554, %v1552
        %v1558 = vmul.f32 %v1554, %v1553
        %v1559 = vsel %vm1052, %v1555, 0.0
        %1560 = vadd.xlane.f32.xlu0 %v1559
        %v1561 = vpop.xlane.xlu0 %1560
        %v1562 = vsel %vm1347, %v1556, 0.0
        %1563 = vadd.xlane.f32.xlu0 %v1562
        %v1564 = vpop.xlane.xlu0 %1563
        %v1565 = vsel %vm1052, %v1557, 0.0
        %1566 = vadd.xlane.f32.xlu0 %v1565
        %v1567 = vpop.xlane.xlu0 %1566
        %v1568 = vsel %vm1347, %v1558, 0.0
        %1569 = vadd.xlane.f32.xlu0 %v1568
        %v1570 = vpop.xlane.xlu0 %1569
        %v1571 = vtanh.pop %v1561
        %v1572 = vtanh.pop %v1564
        %v1573 = vtanh.pop %v1567
        %v1574 = vtanh.pop %v1570
        %v1575 = vmul.f32 %v1571, 10.0
        %v1576 = vmul.f32 %v1572, 10.0
        %v1577 = vmul.f32 %v1573, 10.0
        %v1578 = vmul.f32 %v1574, 10.0
        %v1583 = vperm.slane %v1575, %v1433
        %v1584 = vperm.slane %v1576, %v1435
        %v1585 = vsel %vm1437, %v1584, %v1583
        %v1586 = vperm.slane %v1577, %v1433
        %v1587 = vperm.slane %v1578, %v1435
        %v1588 = vsel %vm1437, %v1587, %v1586
        %v1589 = vsel %vm1442, %v1588, %v1585
        %v1591 = vsel %vm1427, -1e+30, %v1589
        %v1592 = vlaneseq
        %v1593 = vshrl.u32 %v1592, 7
        %vm1594 = vcmask 73728
        %v1595 = vsel %vm1594, %v1591, -inf
        %1596 = vmax.xlane.f32.xlu0 %v1595
        %v1597 = vpop.xlane.xlu0 %1596
        %vm1598 = vcmp.ge.f32.partialorder %v1591, %v1597
        %v1599 = vsel %vm1598, %v1433, 10
        %v1600 = vsel %vm1594, %v1599, 2147483647
        %v1601 = vand.u32 %v1600, 65535
        %v1602 = vshra.s32 %v1600, 16
        %v1603 = vcvt.s32.f32 %v1601
        %v1604 = vcvt.s32.f32 %v1602
        %1605 = vmin.xlane.f32.xlu0 %v1604
        %v1606 = vpop.xlane.xlu0 %1605
        %vm1607 = vcmp.eq.f32.partialorder %v1604, %v1606
        %v1608 = vsel %vm1607, %v1603, inf
        %1609 = vmin.xlane.f32.xlu0 %v1608
        %v1610 = vpop.xlane.xlu0 %1609
        %v1611 = vcvt.f32.s32 %v1610
        %v1612 = vcvt.f32.s32 %v1606
        %v1613 = vshll.u32 %v1612, 16
        %v1614 = vadd.s32 %v1613, %v1611
        %vm1615 = vcmp.gt.s32.totalorder %v1593, 0
        %v1616 = vperm.slane %v1614, 0
        %vm1617 = vcmp.eq.s32.totalorder %v1433, %v1616
        %vm1618 = vmand %vm1615, %vm1617
        %vm1619 = vcmp.ne.s32.totalorder %v1433, 9
        %vm1620 = vmand %vm1618, %vm1619
        %v1621 = vsel %vm1620, -1e+30, %v1591
        %vm1622 = vcmask 74753
        %v1623 = vsel %vm1622, %v1621, -inf
        %1624 = vmax.xlane.f32.xlu0 %v1623
        %v1625 = vpop.xlane.xlu0 %1624
        %vm1626 = vcmp.ge.f32.partialorder %v1621, %v1625
        %v1627 = vsel %vm1626, %v1433, 10
        %v1628 = vsel %vm1622, %v1627, 2147483647
        %v1629 = vand.u32 %v1628, 65535
        %v1630 = vshra.s32 %v1628, 16
        %v1631 = vcvt.s32.f32 %v1629
        %v1632 = vcvt.s32.f32 %v1630
        %1633 = vmin.xlane.f32.xlu0 %v1632
        %v1634 = vpop.xlane.xlu0 %1633
        %vm1635 = vcmp.eq.f32.partialorder %v1632, %v1634
        %v1636 = vsel %vm1635, %v1631, inf
        %1637 = vmin.xlane.f32.xlu0 %v1636
        %v1638 = vpop.xlane.xlu0 %1637
        %v1639 = vcvt.f32.s32 %v1638
        %v1640 = vcvt.f32.s32 %v1634
        %v1641 = vshll.u32 %v1640, 16
        %v1642 = vadd.s32 %v1641, %v1639
        %v1643 = vrot.slane %v1642, 1
        %vm1644 = vcmask 7168
        %v1645 = vsel %vm1644, %v1614, %v1643
        %v1646 = vsel %vm1446, %v1621, -inf
        %1647 = vmax.xlane.f32.xlu0 %v1646
        %v1648 = vpop.xlane.xlu0 %1647
        %v1649 = vsub.f32 %v1621, %v1648
        %v1650 = vmul.f32 %v1649, 1.442695
        %v1651 = vpow.pop %v1650
        %v1652 = vsel %vm1446, %v1651, 0.0
        %1653 = vadd.xlane.f32.xlu0 %v1652
        %v1654 = vpop.xlane.xlu0 %1653
        %v1655 = vlog2.pop %v1654
        %v1656 = vmul.f32 %v1655, 0.6931472
        %v1657 = vadd.f32 %v1648, %v1656
        %v1658 = vsub.f32 %v1621, %v1657
        %1659 = vst.msk [vmem:[%s965] sm:$0x3] %vm1446, %v1658
        %v1660 = vperm.slane %v1645, 0
        %v1661 = vlaneseq
        %v1662 = vshrl.u32 %v1661, 7
        %1664 = vset.pattern.permute.xlu0 %v1662
        %1665 = vperm.xlu0 %1664, %v1660
        %v1666 = vpop.permute.xlu0 %1665
        %vm1667 = vcmask 1024
        %1668 = vst.msk [vmem:[%s1005] sm:$0x3] %vm1667, %v1666
        %vm1669 = vcmp.eq.s32.totalorder %v1433, %v1666
        %v1670 = vsel %vm1669, 1, 0
        %v1671 = vcvt.s32.f32 %v1670
        %v1673 = vsel %vm1471, %v1671, 0
        %v1676 = vsel %vm1475, %v1031, 0
        %1678 = vmatpush.msra.mxu0 0.0
        %1679 = vmatpush.msra.mxu0 0.0
        %1680 = vmatpush.msra.mxu0 0.0
        %1681 = vmatpush.msra.mxu0 0.0
        %1682 = vmatpush.msra.mxu0 0.0
        %1683 = vmatpush.msra.mxu0 0.0
        %1684 = vmatpush.msra.mxu0 0.0
        %1685 = vmatpush.msra.mxu0 0.0
        %1686 = vmatpush.msra.mxu0 0.0
        %1687 = vmatpush.msra.mxu0 0.0
        %1688 = vmatpush.msra.mxu0 0.0
        %1689 = vmatpush.msra.mxu0 0.0
        %1690 = vmatpush.msra.mxu0 0.0
        %1691 = vmatpush.msra.mxu0 0.0
        %1692 = vmatpush.msra.mxu0 %v1676
        %1693 = vmatpush.msra.mxu0 %v1029
        %1694 = vmatmul.f32.gmra.mxu0 %v1673
        %v1695 = vpop.f32.mrf.mxu0
        %v1696 = vadd.f32 0.0, %v1695
        %1697 = vdwg.mxu0
        %1698 = vst.msk [vmem:[%s992] sm:$0x3] %vm1347, %v1696
        %s1699 = sand.u32 %s466, 1
        %s1700 = scalar_lea.sflag [#allocation4], %s1699
        %s1701 = sand.u32 %s466, 1
        %s1702 = smul.addr %s1701, 2
        %s1703 = scalar_lea.vmem [#allocation24], %s1702
        %p1704 = scmp.lt.s32.totalorder %s55, 1
        %s1705 = scalar_select %p1704, %s55, 1
        %s1706 = smul.addr %s1705, 2
        %s1707 = scalar_lea.vmem %s19, %s1706
        %s1708 = sand.u32 %s55, 1
        %s1709 = scalar_lea.sflag [#allocation26], %s1708
        %s1710 = sand.u32 %s518, 1
        %s1711 = smul.addr %s1710, 2
        %s1712 = scalar_lea.vmem [#allocation25], %s1711
        %s1713 = sand.u32 %s55, 1
        %s1714 = scalar_lea.sflag [#allocation26], %s1713
        %s1715 = sand.u32 %s544, 1
        %s1716 = smul.addr %s1715, 2
        %s1717 = scalar_lea.vmem [#allocation27], %s1716
        %s1718 = sand.u32 %s570, 1
        %s1719 = scalar_lea.sflag [#allocation29], %s1718
        %s1720 = sand.u32 %s570, 1
        %s1721 = smul.addr %s1720, 2
        %s1722 = scalar_lea.vmem [#allocation28], %s1721
        // Predicated region
        $region145: #{tpu_custom_call.1} parent=91 // pred_check
          %p1723 = pneg %p476
        $region146: #{tpu_custom_call.1} parent=91 // pred_check_branch
          %1725 = sbr.rel (%p1723) target = $region148
        $region147: #{tpu_custom_call.1} parent=91 // pred_region
          %1727 = vsyncadd %s1700, 0
          %s1728 = smul.addr %s55, 2
          %s1729 = scalar_lea.hbm %s18, %s1728
          %s1731 = sshll.u32 %s1703, 4
          %s1732 = int_to_ptr.vmem [resolvable:$true] %s1731
          %s1733 = sshll.u32 %s1729, 4
          %s1734 = int_to_ptr.hbm [resolvable:$true] %s1733
          %1736 = dma.vmem_to_hbm [thread:$0]  %s1732, 32, %s1734, %s1700
        $region148: #{tpu_custom_call.1} parent=91 // pred_fallthru
          _
        // Predicated region
        $region149: #{tpu_custom_call.1} parent=91 // pred_check
          %p1737 = pneg %p502
        $region150: #{tpu_custom_call.1} parent=91 // pred_check_branch
          %1739 = sbr.rel (%p1737) target = $region152
        $region151: #{tpu_custom_call.1} parent=91 // pred_region
          _
        $region152: #{tpu_custom_call.1} parent=91 // pred_fallthru
          _
        // Predicated region
        $region153: #{tpu_custom_call.1} parent=91 // pred_check
          %p1740 = pneg %p528
        $region154: #{tpu_custom_call.1} parent=91 // pred_check_branch
          %1742 = sbr.rel (%p1740) target = $region156
        $region155: #{tpu_custom_call.1} parent=91 // pred_region
          %1744 = vsyncadd %s1709, 0
          %s1745 = smul.addr %s55, 2
          %s1746 = scalar_lea.hbm %s20, %s1745
          %s1748 = sshll.u32 %s1712, 4
          %s1749 = int_to_ptr.vmem [resolvable:$true] %s1748
          %s1750 = sshll.u32 %s1746, 4
          %s1751 = int_to_ptr.hbm [resolvable:$true] %s1750
          %1753 = dma.vmem_to_hbm [thread:$0]  %s1749, 32, %s1751, %s1709
        $region156: #{tpu_custom_call.1} parent=91 // pred_fallthru
          _
        // Predicated region
        $region157: #{tpu_custom_call.1} parent=91 // pred_check
          %p1754 = pneg %p554
        $region158: #{tpu_custom_call.1} parent=91 // pred_check_branch
          %1756 = sbr.rel (%p1754) target = $region160
        $region159: #{tpu_custom_call.1} parent=91 // pred_region
          %1758 = vsyncadd %s1714, 0
          %s1759 = smul.addr %s55, 2
          %s1760 = scalar_lea.hbm %s21, %s1759
          %s1762 = sshll.u32 %s1717, 4
          %s1763 = int_to_ptr.vmem [resolvable:$true] %s1762
          %s1764 = sshll.u32 %s1760, 4
          %s1765 = int_to_ptr.hbm [resolvable:$true] %s1764
          %1767 = dma.vmem_to_hbm [thread:$0]  %s1763, 32, %s1765, %s1714
        $region160: #{tpu_custom_call.1} parent=91 // pred_fallthru
          _
        // Predicated region
        $region161: #{tpu_custom_call.1} parent=91 // pred_check
          %p1768 = pneg %p580
        $region162: #{tpu_custom_call.1} parent=91 // pred_check_branch
          %1770 = sbr.rel (%p1768) target = $region164
        $region163: #{tpu_custom_call.1} parent=91 // pred_region
          %1772 = vsyncadd %s1719, 0
          %s1773 = smul.addr %s55, 2
          %s1774 = scalar_lea.hbm %s22, %s1773
          %s1776 = sshll.u32 %s1722, 4
          %s1777 = int_to_ptr.vmem [resolvable:$true] %s1776
          %s1778 = sshll.u32 %s1774, 4
          %s1779 = int_to_ptr.hbm [resolvable:$true] %s1778
          %1781 = dma.vmem_to_hbm [thread:$0]  %s1777, 32, %s1779, %s1719
        $region164: #{tpu_custom_call.1} parent=91 // pred_fallthru
          _
      $region92: #{tpu_custom_call.1} parent=5 // pred_fallthru
        _
      %p1782 = scmp.le.s32.totalorder 2, %s50
      // Predicated region
      $region165: #{tpu_custom_call.1} parent=5 // pred_check
        %p1783 = pneg %p1782
      $region166: #{tpu_custom_call.1} parent=5 // pred_check_branch
        %1785 = sbr.rel (%p1783) target = $region168
      $region167: #{tpu_custom_call.1} parent=5 // pred_region
        %s1786 = ssub.s32 %s50, 2
        // Predicated region
        $region169: #{tpu_custom_call.1} parent=167 // pred_check
          %p1787 = pneg %p482
        $region170: #{tpu_custom_call.1} parent=167 // pred_check_branch
          %1789 = sbr.rel (%p1787) target = $region172
        $region171: #{tpu_custom_call.1} parent=167 // pred_region
          %s1790 = sand.u32 %s467, 1
          %s1791 = scalar_lea.sflag [#allocation4], %s1790
          %s1792 = sand.u32 %s467, 1
          %s1793 = smul.addr %s1792, 2
          %s1794 = scalar_lea.vmem [#allocation24], %s1793
          %1796 = dma.done %s1791, 32
        $region172: #{tpu_custom_call.1} parent=167 // pred_fallthru
          _
        // Predicated region
        $region173: #{tpu_custom_call.1} parent=167 // pred_check
          %p1797 = pneg %p508
        $region174: #{tpu_custom_call.1} parent=167 // pred_check_branch
          %1799 = sbr.rel (%p1797) target = $region176
        $region175: #{tpu_custom_call.1} parent=167 // pred_region
          %p1800 = scmp.lt.s32.totalorder %s56, 1
          %s1801 = scalar_select %p1800, %s56, 1
          %s1802 = smul.addr %s1801, 2
          %s1803 = scalar_lea.vmem %s19, %s1802
        $region176: #{tpu_custom_call.1} parent=167 // pred_fallthru
          _
        // Predicated region
        $region177: #{tpu_custom_call.1} parent=167 // pred_check
          %p1804 = pneg %p534
        $region178: #{tpu_custom_call.1} parent=167 // pred_check_branch
          %1806 = sbr.rel (%p1804) target = $region180
        $region179: #{tpu_custom_call.1} parent=167 // pred_region
          %s1807 = sand.u32 %s56, 1
          %s1808 = scalar_lea.sflag [#allocation26], %s1807
          %s1809 = sand.u32 %s519, 1
          %s1810 = smul.addr %s1809, 2
          %s1811 = scalar_lea.vmem [#allocation25], %s1810
          %1813 = dma.done %s1808, 32
        $region180: #{tpu_custom_call.1} parent=167 // pred_fallthru
          _
        // Predicated region
        $region181: #{tpu_custom_call.1} parent=167 // pred_check
          %p1814 = pneg %p560
        $region182: #{tpu_custom_call.1} parent=167 // pred_check_branch
          %1816 = sbr.rel (%p1814) target = $region184
        $region183: #{tpu_custom_call.1} parent=167 // pred_region
          %s1817 = sand.u32 %s56, 1
          %s1818 = scalar_lea.sflag [#allocation26], %s1817
          %s1819 = sand.u32 %s545, 1
          %s1820 = smul.addr %s1819, 2
          %s1821 = scalar_lea.vmem [#allocation27], %s1820
          %1823 = dma.done %s1818, 32
        $region184: #{tpu_custom_call.1} parent=167 // pred_fallthru
          _
        // Predicated region
        $region185: #{tpu_custom_call.1} parent=167 // pred_check
          %p1824 = pneg %p586
        $region186: #{tpu_custom_call.1} parent=167 // pred_check_branch
          %1826 = sbr.rel (%p1824) target = $region188
        $region187: #{tpu_custom_call.1} parent=167 // pred_region
          %s1827 = sand.u32 %s571, 1
          %s1828 = scalar_lea.sflag [#allocation29], %s1827
          %s1829 = sand.u32 %s571, 1
          %s1830 = smul.addr %s1829, 2
          %s1831 = scalar_lea.vmem [#allocation28], %s1830
          %1833 = dma.done %s1828, 32
        $region188: #{tpu_custom_call.1} parent=167 // pred_fallthru
          _
      $region168: #{tpu_custom_call.1} parent=5 // pred_fallthru
        _
    $region6: #{tpu_custom_call.1} parent=1 // loop_footer
      %s54 = sadd.s32 1, %s50
    $region7: #{tpu_custom_call.1} parent=1 // loop_footer_branch
      %49 = sbr.rel target = $region3
    $region8: #{tpu_custom_call.1} parent=1 // loop_exit
      _
    %1834 = vsyncpa [#allocation3], 1
    %s1835 = scalar_lea.sflag [#allocation3], 1
    %1836 = vsyncpa %s1835, 1
    %1837 = vsyncpa [#allocation7], 1
    %s1838 = scalar_lea.sflag [#allocation7], 1
    %1839 = vsyncpa %s1838, 1
    %1840 = vsyncpa [#allocation10], 1
    %1841 = vsyncpa [#allocation13], 1
    %1842 = vsyncpa [#allocation16], 1
    %1843 = vsyncpa [#allocation19], 1
    %1844 = vsyncpa [#allocation22], 1
    %1845 = vsyncpa [#allocation4], 1
    %s1846 = scalar_lea.sflag [#allocation4], 1
    %1847 = vsyncpa %s1846, 1
    %1848 = vsyncpa [#allocation26], 1
    %s1849 = scalar_lea.sflag [#allocation26], 1
    %1850 = vsyncpa %s1849, 1
    %1851 = vsyncpa [#allocation29], 1
    %s1852 = scalar_lea.sflag [#allocation29], 1
    %1853 = vsyncpa %s1852, 1
    %1854 = vsyncpa [#allocation5], 1
    %s1855 = scalar_lea.sflag [#allocation5], 1
    %1856 = vsyncpa %s1855, 1

</llo_original>
